<compile_context>
chip_gen: v6e
topology: v6e:2x2x1
jax: 0.10.0
libtpu: 0.0.40
codegen_flags: <defaults>
</compile_context>

<pallas_src>
import functools
from math import sqrt

import jax
import jax.numpy as jnp
from jax.experimental import pallas as pl
from jax.experimental.pallas import tpu as pltpu


def _mha_kernel(x_ref, wqkv_ref, bqkv_ref, wo_ref, bo_ref, o_ref, *,
                num_heads: int, head_dim: int):
    """Single invocation processes the full batch.

    x_ref    : (B, S, E)   f32  VMEM
    wqkv_ref : (E, 3E)     bf16 fused [Wq | Wk | Wv] (head-major columns inside each block)
    bqkv_ref : (1, 3E)     f32
    wo_ref   : (E, E)      bf16
    bo_ref   : (1, E)      f32
    o_ref    : (B, S, E)   f32
    """
    B, S, E = x_ref.shape
    H, hd = num_heads, head_dim
    BS = B * S

    # ---- Fused QKV projection: one (B*S, E) x (E, 3E) bf16 MXU matmul. ----
    x2 = x_ref[...].reshape(BS, E).astype(jnp.bfloat16)
    qkv = jnp.dot(x2, wqkv_ref[...], preferred_element_type=jnp.float32)
    qkv = qkv + bqkv_ref[...]                       # f32 bias add
    qkv = qkv.reshape(B, S, 3 * E)

    scale = 1.0 / sqrt(float(hd))
    # E-wide, tile-aligned (lane-dense) slices of the fused result.
    q = qkv[..., 0 * E:1 * E] * scale               # scale folded into q
    k = qkv[..., 1 * E:2 * E]
    v = qkv[..., 2 * E:3 * E]
    q_b = q.astype(jnp.bfloat16)
    k_b = k.astype(jnp.bfloat16)
    v_b = v.astype(jnp.bfloat16)

    # ---- Per-head scaled dot-product attention (softmax math in f32). ----
    ctx_heads = []
    for h in range(H):                              # H is small & static: unrolled
        lo = h * hd
        # Q K^T with K^T absorbed into the contraction (no explicit transpose).
        s = jnp.einsum("bqd,bkd->bqk",
                       q_b[..., lo:lo + hd], k_b[..., lo:lo + hd],
                       preferred_element_type=jnp.float32)           # (B,S,S) f32
        s_max = jnp.max(s, axis=-1, keepdims=True)
        p = jnp.exp(s - s_max)
        l = jnp.sum(p, axis=-1, keepdims=True)
        ctx = jnp.einsum("bqk,bkd->bqd",
                         p.astype(jnp.bfloat16), v_b[..., lo:lo + hd],
                         preferred_element_type=jnp.float32)          # (B,S,hd)
        # Normalize the small context instead of the (S,S) probabilities.
        ctx_heads.append(ctx * pl.reciprocal(l, approx=True))
    ctx_all = jnp.concatenate(ctx_heads, axis=-1)    # (B,S,E) hd-wide lane concat

    # ---- Output projection: one (B*S, E) x (E, E) bf16 MXU matmul. ----
    ctx2 = ctx_all.reshape(BS, E).astype(jnp.bfloat16)
    out = jnp.dot(ctx2, wo_ref[...], preferred_element_type=jnp.float32)
    out = out + bo_ref[...]
    o_ref[...] = out.reshape(B, S, E).astype(o_ref.dtype)


def multi_head_attention(x, params, *, num_heads: int):
    """x: [B, S, E] float32. params: torch-style [in, out] weights (see _init_params)."""
    B, S, E = x.shape
    H = num_heads
    hd = E // H

    # Host-side (XLA) repacking: fuse [Wq | Wk | Wv] along the output dim so the
    # kernel runs one N=3E matmul.  Columns inside each E-wide block are already
    # head-major (column block h*hd:(h+1)*hd belongs to head h).  Weights are
    # cast to bf16 once here (halves DMA bytes + VMEM residency); biases stay f32.
    wqkv = jnp.concatenate([params["wq"], params["wk"], params["wv"]],
                           axis=1).astype(jnp.bfloat16)               # (E, 3E)
    bqkv = jnp.concatenate([params["bq"], params["bk"], params["bv"]],
                           axis=1)                                    # (1, 3E) f32
    wo = params["wo"].astype(jnp.bfloat16)                            # (E, E)
    bo = params["bo"]                                                 # (1, E)  f32

    kernel = functools.partial(_mha_kernel, num_heads=H, head_dim=hd)

    flops = (2 * B * S * E * 3 * E          # fused QKV projection
             + 4 * H * B * S * S * hd       # Q K^T and P V
             + 2 * B * S * E * E)           # output projection
    bytes_accessed = (4 * 2 * x.size                 # x in + out (f32)
                      + 2 * (wqkv.size + wo.size)    # bf16 weights
                      + 4 * (bqkv.size + bo.size))   # f32 biases

    return pl.pallas_call(
        kernel,
        out_shape=jax.ShapeDtypeStruct((B, S, E), x.dtype),
        grid_spec=pltpu.PrefetchScalarGridSpec(
            num_scalar_prefetch=0,
            grid=(1,),                               # single invocation: whole batch
            in_specs=[
                pl.BlockSpec((B, S, E), lambda i: (0, 0, 0)),      # x
                pl.BlockSpec((E, 3 * E), lambda i: (0, 0)),        # fused Wqkv (bf16)
                pl.BlockSpec((1, 3 * E), lambda i: (0, 0)),        # fused bqkv
                pl.BlockSpec((E, E), lambda i: (0, 0)),            # Wo (bf16)
                pl.BlockSpec((1, E), lambda i: (0, 0)),            # bo
            ],
            out_specs=pl.BlockSpec((B, S, E), lambda i: (0, 0, 0)),
        ),
        compiler_params=pltpu.CompilerParams(
            dimension_semantics=("arbitrary",)),
        cost_estimate=pl.CostEstimate(flops=flops,
                                      transcendentals=B * H * S * S,
                                      bytes_accessed=bytes_accessed),
    )(x, wqkv, bqkv, wo, bo)


def _reference(x, params, *, num_heads: int):
    """Pure-JAX f32 reference matching the PyTorch module semantics."""
    B, S, E = x.shape
    hd = E // num_heads
    q = x @ params["wq"] + params["bq"]
    k = x @ params["wk"] + params["bk"]
    v = x @ params["wv"] + params["bv"]
    outs = []
    for h in range(num_heads):
        qh, kh, vh = (t[..., h * hd:(h + 1) * hd] for t in (q, k, v))
        a = jnp.einsum("bqd,bkd->bqk", qh, kh) / sqrt(hd)
        a = jax.nn.softmax(a, axis=-1)
        outs.append(jnp.einsum("bqk,bkd->bqd", a, vh))
    concat = jnp.concatenate(outs, axis=-1)
    return concat @ params["wo"] + params["bo"]


def _init_params(key, embed_dim: int, num_heads: int):
    """Deterministic synthetic weights, torch-Linear style but stored [in, out].
    Per-head q/k/v Linears are packed into [E, E] matrices (column block
    h*hd:(h+1)*hd belongs to head h)."""
    ks = jax.random.split(key, 8)
    scale = 1.0 / sqrt(embed_dim)
    mk = lambda k: jax.random.uniform(k, (embed_dim, embed_dim),
                                      jnp.float32, -scale, scale)
    bk = lambda k: jax.random.uniform(k, (1, embed_dim),
                                      jnp.float32, -scale, scale)
    return {
        "wq": mk(ks[0]), "bq": bk(ks[1]),
        "wk": mk(ks[2]), "bk": bk(ks[3]),
        "wv": mk(ks[4]), "bv": bk(ks[5]),
        "wo": mk(ks[6]), "bo": bk(ks[7]),
    }


if __name__ == "__main__":
    # batch=2, seq=8, hidden=128 (multiple of 128 -> lane-dense stores),
    # 4 heads -> head_dim=32.
    B, S, E, H = 2, 8, 128, 4

    key = jax.random.PRNGKey(0)
    k_x, k_p = jax.random.split(key)
    x = jax.random.normal(k_x, (B, S, E), jnp.float32)
    params = _init_params(k_p, E, H)

    out = multi_head_attention(x, params, num_heads=H)
    out = jax.block_until_ready(out)

    ref = _reference(x, params, num_heads=H)
    assert out.shape == (B, S, E)
    # Tolerance absorbs bf16 MXU operands (f32 accumulation) and the
    # approximate (EUP) softmax reciprocal vs. the pure-f32 reference.
    assert jnp.allclose(out, ref, atol=5e-2, rtol=5e-2), \
        float(jnp.max(jnp.abs(out - ref)))

    print("KERNEL_OK")
</pallas_src>

<mosaic_0001>
module attributes {stable_mosaic.version = 11 : i64} {
  func.func @_mha_kernel(%arg0: i32, %arg1: memref<2x8x128xf32, #tpu.memory_space<vmem>>, %arg2: memref<128x384xbf16, #tpu.memory_space<vmem>>, %arg3: memref<1x384xf32, #tpu.memory_space<vmem>>, %arg4: memref<128x128xbf16, #tpu.memory_space<vmem>>, %arg5: memref<1x128xf32, #tpu.memory_space<vmem>>, %arg6: memref<2x8x128xf32, #tpu.memory_space<vmem>>) attributes {dimension_semantics = [#tpu.dimension_semantics<arbitrary>], iteration_bounds = array<i64: 1>, scalar_prefetch = 0 : i64, scratch_operands = 0 : i64, tpu.core_type = #tpu.core_type<tc>, window_params = [{pipeline_mode = #tpu.pipeline_mode<synchronous>, transform_indices = @transform_0, window_bounds = array<i64: 2, 8, 128>}, {pipeline_mode = #tpu.pipeline_mode<synchronous>, transform_indices = @transform_1, window_bounds = array<i64: 128, 384>}, {pipeline_mode = #tpu.pipeline_mode<synchronous>, transform_indices = @transform_2, window_bounds = array<i64: 1, 384>}, {pipeline_mode = #tpu.pipeline_mode<synchronous>, transform_indices = @transform_3, window_bounds = array<i64: 128, 128>}, {pipeline_mode = #tpu.pipeline_mode<synchronous>, transform_indices = @transform_4, window_bounds = array<i64: 1, 128>}, {pipeline_mode = #tpu.pipeline_mode<synchronous>, transform_indices = @transform_5, window_bounds = array<i64: 2, 8, 128>}]} {
    %c0 = arith.constant 0 : index
    %c0_0 = arith.constant 0 : index
    %c0_1 = arith.constant 0 : index
    %0 = vector.load %arg1[%c0, %c0_0, %c0_1] : memref<2x8x128xf32, #tpu.memory_space<vmem>>, vector<2x8x128xf32>
    %1 = vector.shape_cast %0 : vector<2x8x128xf32> to vector<16x128xf32>
    %2 = arith.truncf %1 : vector<16x128xf32> to vector<16x128xbf16>
    %c0_2 = arith.constant 0 : index
    %c0_3 = arith.constant 0 : index
    %3 = vector.load %arg2[%c0_2, %c0_3] : memref<128x384xbf16, #tpu.memory_space<vmem>>, vector<128x384xbf16>
    %cst = arith.constant dense<0.000000e+00> : vector<16x384xf32>
    %4 = tpu.matmul %2, %3, %cst {dimension_numbers = #tpu.dot_dimension_numbers<[1], [0], [0], [1], [0, 0, 1, 1], [], []>} : vector<16x128xbf16>, vector<128x384xbf16>, vector<16x384xf32> -> vector<16x384xf32>
    %c0_4 = arith.constant 0 : index
    %c0_5 = arith.constant 0 : index
    %5 = vector.load %arg3[%c0_4, %c0_5] : memref<1x384xf32, #tpu.memory_space<vmem>>, vector<1x384xf32>
    %6 = vector.broadcast %5 : vector<1x384xf32> to vector<16x384xf32>
    %7 = arith.addf %4, %6 : vector<16x384xf32>
    %8 = vector.shape_cast %7 : vector<16x384xf32> to vector<2x8x384xf32>
    %9 = vector.extract_strided_slice %8 {offsets = [0, 0, 0], sizes = [2, 8, 128], strides = [1, 1, 1]} : vector<2x8x384xf32> to vector<2x8x128xf32>
    %cst_6 = arith.constant 0.176776692 : f32
    %10 = vector.broadcast %cst_6 : f32 to vector<2x8x128xf32>
    %11 = arith.mulf %9, %10 : vector<2x8x128xf32>
    %12 = vector.extract_strided_slice %8 {offsets = [0, 0, 128], sizes = [2, 8, 128], strides = [1, 1, 1]} : vector<2x8x384xf32> to vector<2x8x128xf32>
    %13 = vector.extract_strided_slice %8 {offsets = [0, 0, 256], sizes = [2, 8, 128], strides = [1, 1, 1]} : vector<2x8x384xf32> to vector<2x8x128xf32>
    %14 = arith.truncf %11 : vector<2x8x128xf32> to vector<2x8x128xbf16>
    %15 = arith.truncf %12 : vector<2x8x128xf32> to vector<2x8x128xbf16>
    %16 = arith.truncf %13 : vector<2x8x128xf32> to vector<2x8x128xbf16>
    %17 = vector.extract_strided_slice %14 {offsets = [0, 0, 0], sizes = [2, 8, 32], strides = [1, 1, 1]} : vector<2x8x128xbf16> to vector<2x8x32xbf16>
    %18 = vector.extract_strided_slice %15 {offsets = [0, 0, 0], sizes = [2, 8, 32], strides = [1, 1, 1]} : vector<2x8x128xbf16> to vector<2x8x32xbf16>
    "tpu.trace_start"() <{level = 10 : i32, message = "bqd,bkd->bqk"}> : () -> ()
    %cst_7 = arith.constant dense<0.000000e+00> : vector<2x8x8xf32>
    %19 = tpu.matmul %17, %18, %cst_7 {dimension_numbers = #tpu.dot_dimension_numbers<[2], [2], [1], [1], [0, 0, 0, 1, 1, 1], [0], [0]>} : vector<2x8x32xbf16>, vector<2x8x32xbf16>, vector<2x8x8xf32> -> vector<2x8x8xf32>
    "tpu.trace_stop"() : () -> ()
    %cst_8 = arith.constant dense<0xFF800000> : vector<2x8xf32>
    %20 = vector.multi_reduction <maximumf>, %19, %cst_8 [2] : vector<2x8x8xf32> to vector<2x8xf32>
    %21 = vector.shape_cast %20 : vector<2x8xf32> to vector<2x8x1xf32>
    %22 = vector.broadcast %21 : vector<2x8x1xf32> to vector<2x8x8xf32>
    %23 = arith.subf %19, %22 : vector<2x8x8xf32>
    %24 = math.exp %23 : vector<2x8x8xf32>
    %cst_9 = arith.constant dense<0.000000e+00> : vector<2x8xf32>
    %25 = vector.multi_reduction <add>, %24, %cst_9 [2] : vector<2x8x8xf32> to vector<2x8xf32>
    %26 = vector.shape_cast %25 : vector<2x8xf32> to vector<2x8x1xf32>
    %27 = arith.truncf %24 : vector<2x8x8xf32> to vector<2x8x8xbf16>
    %28 = vector.extract_strided_slice %16 {offsets = [0, 0, 0], sizes = [2, 8, 32], strides = [1, 1, 1]} : vector<2x8x128xbf16> to vector<2x8x32xbf16>
    "tpu.trace_start"() <{level = 10 : i32, message = "bqk,bkd->bqd"}> : () -> ()
    %cst_10 = arith.constant dense<0.000000e+00> : vector<2x8x32xf32>
    %29 = tpu.matmul %27, %28, %cst_10 {dimension_numbers = #tpu.dot_dimension_numbers<[2], [1], [1], [2], [0, 0, 0, 1, 1, 2], [0], [0]>} : vector<2x8x8xbf16>, vector<2x8x32xbf16>, vector<2x8x32xf32> -> vector<2x8x32xf32>
    "tpu.trace_stop"() : () -> ()
    %30 = tpu.reciprocal %26 {approx = true} : vector<2x8x1xf32> -> vector<2x8x1xf32>
    %31 = vector.broadcast %30 : vector<2x8x1xf32> to vector<2x8x32xf32>
    %32 = arith.mulf %29, %31 : vector<2x8x32xf32>
    %33 = vector.extract_strided_slice %14 {offsets = [0, 0, 32], sizes = [2, 8, 32], strides = [1, 1, 1]} : vector<2x8x128xbf16> to vector<2x8x32xbf16>
    %34 = vector.extract_strided_slice %15 {offsets = [0, 0, 32], sizes = [2, 8, 32], strides = [1, 1, 1]} : vector<2x8x128xbf16> to vector<2x8x32xbf16>
    "tpu.trace_start"() <{level = 10 : i32, message = "bqd,bkd->bqk"}> : () -> ()
    %cst_11 = arith.constant dense<0.000000e+00> : vector<2x8x8xf32>
    %35 = tpu.matmul %33, %34, %cst_11 {dimension_numbers = #tpu.dot_dimension_numbers<[2], [2], [1], [1], [0, 0, 0, 1, 1, 1], [0], [0]>} : vector<2x8x32xbf16>, vector<2x8x32xbf16>, vector<2x8x8xf32> -> vector<2x8x8xf32>
    "tpu.trace_stop"() : () -> ()
    %cst_12 = arith.constant dense<0xFF800000> : vector<2x8xf32>
    %36 = vector.multi_reduction <maximumf>, %35, %cst_12 [2] : vector<2x8x8xf32> to vector<2x8xf32>
    %37 = vector.shape_cast %36 : vector<2x8xf32> to vector<2x8x1xf32>
    %38 = vector.broadcast %37 : vector<2x8x1xf32> to vector<2x8x8xf32>
    %39 = arith.subf %35, %38 : vector<2x8x8xf32>
    %40 = math.exp %39 : vector<2x8x8xf32>
    %cst_13 = arith.constant dense<0.000000e+00> : vector<2x8xf32>
    %41 = vector.multi_reduction <add>, %40, %cst_13 [2] : vector<2x8x8xf32> to vector<2x8xf32>
    %42 = vector.shape_cast %41 : vector<2x8xf32> to vector<2x8x1xf32>
    %43 = arith.truncf %40 : vector<2x8x8xf32> to vector<2x8x8xbf16>
    %44 = vector.extract_strided_slice %16 {offsets = [0, 0, 32], sizes = [2, 8, 32], strides = [1, 1, 1]} : vector<2x8x128xbf16> to vector<2x8x32xbf16>
    "tpu.trace_start"() <{level = 10 : i32, message = "bqk,bkd->bqd"}> : () -> ()
    %cst_14 = arith.constant dense<0.000000e+00> : vector<2x8x32xf32>
    %45 = tpu.matmul %43, %44, %cst_14 {dimension_numbers = #tpu.dot_dimension_numbers<[2], [1], [1], [2], [0, 0, 0, 1, 1, 2], [0], [0]>} : vector<2x8x8xbf16>, vector<2x8x32xbf16>, vector<2x8x32xf32> -> vector<2x8x32xf32>
    "tpu.trace_stop"() : () -> ()
    %46 = tpu.reciprocal %42 {approx = true} : vector<2x8x1xf32> -> vector<2x8x1xf32>
    %47 = vector.broadcast %46 : vector<2x8x1xf32> to vector<2x8x32xf32>
    %48 = arith.mulf %45, %47 : vector<2x8x32xf32>
    %49 = vector.extract_strided_slice %14 {offsets = [0, 0, 64], sizes = [2, 8, 32], strides = [1, 1, 1]} : vector<2x8x128xbf16> to vector<2x8x32xbf16>
    %50 = vector.extract_strided_slice %15 {offsets = [0, 0, 64], sizes = [2, 8, 32], strides = [1, 1, 1]} : vector<2x8x128xbf16> to vector<2x8x32xbf16>
    "tpu.trace_start"() <{level = 10 : i32, message = "bqd,bkd->bqk"}> : () -> ()
    %cst_15 = arith.constant dense<0.000000e+00> : vector<2x8x8xf32>
    %51 = tpu.matmul %49, %50, %cst_15 {dimension_numbers = #tpu.dot_dimension_numbers<[2], [2], [1], [1], [0, 0, 0, 1, 1, 1], [0], [0]>} : vector<2x8x32xbf16>, vector<2x8x32xbf16>, vector<2x8x8xf32> -> vector<2x8x8xf32>
    "tpu.trace_stop"() : () -> ()
    %cst_16 = arith.constant dense<0xFF800000> : vector<2x8xf32>
    %52 = vector.multi_reduction <maximumf>, %51, %cst_16 [2] : vector<2x8x8xf32> to vector<2x8xf32>
    %53 = vector.shape_cast %52 : vector<2x8xf32> to vector<2x8x1xf32>
    %54 = vector.broadcast %53 : vector<2x8x1xf32> to vector<2x8x8xf32>
    %55 = arith.subf %51, %54 : vector<2x8x8xf32>
    %56 = math.exp %55 : vector<2x8x8xf32>
    %cst_17 = arith.constant dense<0.000000e+00> : vector<2x8xf32>
    %57 = vector.multi_reduction <add>, %56, %cst_17 [2] : vector<2x8x8xf32> to vector<2x8xf32>
    %58 = vector.shape_cast %57 : vector<2x8xf32> to vector<2x8x1xf32>
    %59 = arith.truncf %56 : vector<2x8x8xf32> to vector<2x8x8xbf16>
    %60 = vector.extract_strided_slice %16 {offsets = [0, 0, 64], sizes = [2, 8, 32], strides = [1, 1, 1]} : vector<2x8x128xbf16> to vector<2x8x32xbf16>
    "tpu.trace_start"() <{level = 10 : i32, message = "bqk,bkd->bqd"}> : () -> ()
    %cst_18 = arith.constant dense<0.000000e+00> : vector<2x8x32xf32>
    %61 = tpu.matmul %59, %60, %cst_18 {dimension_numbers = #tpu.dot_dimension_numbers<[2], [1], [1], [2], [0, 0, 0, 1, 1, 2], [0], [0]>} : vector<2x8x8xbf16>, vector<2x8x32xbf16>, vector<2x8x32xf32> -> vector<2x8x32xf32>
    "tpu.trace_stop"() : () -> ()
    %62 = tpu.reciprocal %58 {approx = true} : vector<2x8x1xf32> -> vector<2x8x1xf32>
    %63 = vector.broadcast %62 : vector<2x8x1xf32> to vector<2x8x32xf32>
    %64 = arith.mulf %61, %63 : vector<2x8x32xf32>
    %65 = vector.extract_strided_slice %14 {offsets = [0, 0, 96], sizes = [2, 8, 32], strides = [1, 1, 1]} : vector<2x8x128xbf16> to vector<2x8x32xbf16>
    %66 = vector.extract_strided_slice %15 {offsets = [0, 0, 96], sizes = [2, 8, 32], strides = [1, 1, 1]} : vector<2x8x128xbf16> to vector<2x8x32xbf16>
    "tpu.trace_start"() <{level = 10 : i32, message = "bqd,bkd->bqk"}> : () -> ()
    %cst_19 = arith.constant dense<0.000000e+00> : vector<2x8x8xf32>
    %67 = tpu.matmul %65, %66, %cst_19 {dimension_numbers = #tpu.dot_dimension_numbers<[2], [2], [1], [1], [0, 0, 0, 1, 1, 1], [0], [0]>} : vector<2x8x32xbf16>, vector<2x8x32xbf16>, vector<2x8x8xf32> -> vector<2x8x8xf32>
    "tpu.trace_stop"() : () -> ()
    %cst_20 = arith.constant dense<0xFF800000> : vector<2x8xf32>
    %68 = vector.multi_reduction <maximumf>, %67, %cst_20 [2] : vector<2x8x8xf32> to vector<2x8xf32>
    %69 = vector.shape_cast %68 : vector<2x8xf32> to vector<2x8x1xf32>
    %70 = vector.broadcast %69 : vector<2x8x1xf32> to vector<2x8x8xf32>
    %71 = arith.subf %67, %70 : vector<2x8x8xf32>
    %72 = math.exp %71 : vector<2x8x8xf32>
    %cst_21 = arith.constant dense<0.000000e+00> : vector<2x8xf32>
    %73 = vector.multi_reduction <add>, %72, %cst_21 [2] : vector<2x8x8xf32> to vector<2x8xf32>
    %74 = vector.shape_cast %73 : vector<2x8xf32> to vector<2x8x1xf32>
    %75 = arith.truncf %72 : vector<2x8x8xf32> to vector<2x8x8xbf16>
    %76 = vector.extract_strided_slice %16 {offsets = [0, 0, 96], sizes = [2, 8, 32], strides = [1, 1, 1]} : vector<2x8x128xbf16> to vector<2x8x32xbf16>
    "tpu.trace_start"() <{level = 10 : i32, message = "bqk,bkd->bqd"}> : () -> ()
    %cst_22 = arith.constant dense<0.000000e+00> : vector<2x8x32xf32>
    %77 = tpu.matmul %75, %76, %cst_22 {dimension_numbers = #tpu.dot_dimension_numbers<[2], [1], [1], [2], [0, 0, 0, 1, 1, 2], [0], [0]>} : vector<2x8x8xbf16>, vector<2x8x32xbf16>, vector<2x8x32xf32> -> vector<2x8x32xf32>
    "tpu.trace_stop"() : () -> ()
    %78 = tpu.reciprocal %74 {approx = true} : vector<2x8x1xf32> -> vector<2x8x1xf32>
    %79 = vector.broadcast %78 : vector<2x8x1xf32> to vector<2x8x32xf32>
    %80 = arith.mulf %77, %79 : vector<2x8x32xf32>
    %81 = tpu.concatenate %32, %48, %64, %80 in 2 : vector<2x8x32xf32>, vector<2x8x32xf32>, vector<2x8x32xf32>, vector<2x8x32xf32> -> vector<2x8x128xf32>
    %82 = vector.shape_cast %81 : vector<2x8x128xf32> to vector<16x128xf32>
    %83 = arith.truncf %82 : vector<16x128xf32> to vector<16x128xbf16>
    %c0_23 = arith.constant 0 : index
    %c0_24 = arith.constant 0 : index
    %84 = vector.load %arg4[%c0_23, %c0_24] : memref<128x128xbf16, #tpu.memory_space<vmem>>, vector<128x128xbf16>
    %cst_25 = arith.constant dense<0.000000e+00> : vector<16x128xf32>
    %85 = tpu.matmul %83, %84, %cst_25 {dimension_numbers = #tpu.dot_dimension_numbers<[1], [0], [0], [1], [0, 0, 1, 1], [], []>} : vector<16x128xbf16>, vector<128x128xbf16>, vector<16x128xf32> -> vector<16x128xf32>
    %c0_26 = arith.constant 0 : index
    %c0_27 = arith.constant 0 : index
    %86 = vector.load %arg5[%c0_26, %c0_27] : memref<1x128xf32, #tpu.memory_space<vmem>>, vector<1x128xf32>
    %87 = vector.broadcast %86 : vector<1x128xf32> to vector<16x128xf32>
    %88 = arith.addf %85, %87 : vector<16x128xf32>
    %89 = vector.shape_cast %88 : vector<16x128xf32> to vector<2x8x128xf32>
    %c0_28 = arith.constant 0 : index
    %c0_29 = arith.constant 0 : index
    %c0_30 = arith.constant 0 : index
    %90 = vector.load %arg6[%c0_28, %c0_29, %c0_30] : memref<2x8x128xf32, #tpu.memory_space<vmem>>, vector<2x8x128xf32>
    tpu.vector_store %arg6[%c0_28, %c0_29, %c0_30], %89 {strides = array<i32>} : memref<2x8x128xf32, #tpu.memory_space<vmem>>, vector<2x8x128xf32>,
    return
  }
  func.func @transform_0(%arg0: i32) -> (i32, i32, i32) {
    %c0_i32 = arith.constant 0 : i32
    %c0_i32_0 = arith.constant 0 : i32
    %c0_i32_1 = arith.constant 0 : i32
    %c0_i32_2 = arith.constant 0 : i32
    return %c0_i32, %c0_i32_0, %c0_i32_1 : i32, i32, i32
  }
  func.func @transform_1(%arg0: i32) -> (i32, i32) {
    %c0_i32 = arith.constant 0 : i32
    %c0_i32_0 = arith.constant 0 : i32
    %c0_i32_1 = arith.constant 0 : i32
    return %c0_i32, %c0_i32_0 : i32, i32
  }
  func.func @transform_2(%arg0: i32) -> (i32, i32) {
    %c0_i32 = arith.constant 0 : i32
    %c0_i32_0 = arith.constant 0 : i32
    %c0_i32_1 = arith.constant 0 : i32
    return %c0_i32, %c0_i32_0 : i32, i32
  }
  func.func @transform_3(%arg0: i32) -> (i32, i32) {
    %c0_i32 = arith.constant 0 : i32
    %c0_i32_0 = arith.constant 0 : i32
    %c0_i32_1 = arith.constant 0 : i32
    return %c0_i32, %c0_i32_0 : i32, i32
  }
  func.func @transform_4(%arg0: i32) -> (i32, i32) {
    %c0_i32 = arith.constant 0 : i32
    %c0_i32_0 = arith.constant 0 : i32
    %c0_i32_1 = arith.constant 0 : i32
    return %c0_i32, %c0_i32_0 : i32, i32
  }
  func.func @transform_5(%arg0: i32) -> (i32, i32, i32) {
    %c0_i32 = arith.constant 0 : i32
    %c0_i32_0 = arith.constant 0 : i32
    %c0_i32_1 = arith.constant 0 : i32
    %c0_i32_2 = arith.constant 0 : i32
    return %c0_i32, %c0_i32_0, %c0_i32_1 : i32, i32, i32
  }
}

</mosaic_0001>

<llo_original>
// kernel: tpu_custom_call.1
$region0: #{tpu_custom_call.1}
  #allocation0 [shape = 'u32[]', space=smem, size = 0x4, offset = 0x4, fixed_abs, tag = 'smem constant byte address 0x4 - core index']
  #allocation1 [shape = 'u32[144,128]{1,0:T(1,128)}', space=vmem, size = 0x12000, scoped, tag = 'internal scratch']
  %s0 = inlined_call_operand.hbm [shape: f32[2,8,128], index: 0, kind: input, shape index: {}]
  %s1 = inlined_call_operand.hbm [shape: bf16[128,384], index: 1, kind: input, shape index: {}]
  %s2 = inlined_call_operand.vmem [shape: f32[1,384], index: 2, kind: input, shape index: {}]
  %s3 = inlined_call_operand.hbm [shape: bf16[128,128], index: 3, kind: input, shape index: {}]
  %s4 = inlined_call_operand.vmem [shape: f32[1,128], index: 4, kind: input, shape index: {}]
  %s5 = inlined_call_operand.hbm [shape: f32[2,8,128], index: 5, kind: output, shape index: {}]
  %s6 = sld [smem:[#allocation0]]
  $region42: #{tpu_custom_call.1} parent=0
    _
  %s8 = ssub.s32 1, %s6
  %s9 = scalar_select 0, %s8, %s6
  $region1: #{tpu_custom_call.1} parent=0
    #allocation2 [shape = 'u8[8192]{0}', space=vmem, size = 0x2000, scoped, tag = 'input window, operand 0, single buffered']
    #allocation3 [shape = 's32[1]{0}', space=sflag, size = 0x4, scoped, tag = 'scoped memory for tpu_custom_call.1']
    #allocation4 [shape = 's32[1]{0}', space=sflag, size = 0x4, scoped, tag = 'scoped memory for tpu_custom_call.1']
    #allocation5 [shape = 'u8[98304]{0}', space=vmem, size = 0x18000, scoped, tag = 'input window, operand 1, single buffered']
    #allocation6 [shape = 's32[1]{0}', space=sflag, size = 0x4, scoped, tag = 'scoped memory for tpu_custom_call.1']
    #allocation7 [shape = 'u8[32768]{0}', space=vmem, size = 0x8000, scoped, tag = 'input window, operand 3, single buffered']
    #allocation8 [shape = 'u8[8192]{0}', space=vmem, size = 0x2000, scoped, tag = 'output window, operand 0, single buffered']
    %10 = vsyncpa [#allocation3], 0
    %11 = vsyncpa [#allocation6], 0
    %12 = vsyncpa [#allocation4], 0
    // Predicated region
    $region2: #{tpu_custom_call.1} parent=1 // pred_check
      _
    $region3: #{tpu_custom_call.1} parent=1 // pred_check_branch
      %14 = sbr.rel (0) target = $region5
    $region4: #{tpu_custom_call.1} parent=1 // pred_region
      %s16 = ssub.s32 256, 256
      %17 = vsyncadd [#allocation3], %s16
      %s18 = sshll.u32 [#allocation2], 4
      %s19 = int_to_ptr.vmem [resolvable:$true] %s18
      %24 = dma.hbm_to_vmem [thread:$0]  %s0, 256, %s19, [#allocation3], 128, 128, 8
    $region5: #{tpu_custom_call.1} parent=1 // pred_fallthru
      _
    // Predicated region
    $region6: #{tpu_custom_call.1} parent=1 // pred_check
      _
    $region7: #{tpu_custom_call.1} parent=1 // pred_check_branch
      %26 = sbr.rel (0) target = $region9
    $region8: #{tpu_custom_call.1} parent=1 // pred_region
      %s28 = ssub.s32 3072, 3072
      %29 = vsyncadd [#allocation6], %s28
      %s30 = sshll.u32 [#allocation5], 4
      %s31 = int_to_ptr.vmem [resolvable:$true] %s30
      %36 = dma.hbm_to_vmem [thread:$0]  %s1, 3072, %s31, [#allocation6], 192, 192, 12
    $region9: #{tpu_custom_call.1} parent=1 // pred_fallthru
      _
    // Predicated region
    $region10: #{tpu_custom_call.1} parent=1 // pred_check
      _
    $region11: #{tpu_custom_call.1} parent=1 // pred_check_branch
      %38 = sbr.rel (0) target = $region13
    $region12: #{tpu_custom_call.1} parent=1 // pred_region
      _
    $region13: #{tpu_custom_call.1} parent=1 // pred_fallthru
      _
    // Predicated region
    $region14: #{tpu_custom_call.1} parent=1 // pred_check
      _
    $region15: #{tpu_custom_call.1} parent=1 // pred_check_branch
      %40 = sbr.rel (0) target = $region17
    $region16: #{tpu_custom_call.1} parent=1 // pred_region
      %s42 = ssub.s32 1024, 1024
      %43 = vsyncadd [#allocation6], %s42
      %s44 = sshll.u32 [#allocation7], 4
      %s45 = int_to_ptr.vmem [resolvable:$true] %s44
      %50 = dma.hbm_to_vmem [thread:$0]  %s3, 1024, %s45, [#allocation6], 64, 64, 4
    $region17: #{tpu_custom_call.1} parent=1 // pred_fallthru
      _
    // Predicated region
    $region18: #{tpu_custom_call.1} parent=1 // pred_check
      _
    $region19: #{tpu_custom_call.1} parent=1 // pred_check_branch
      %52 = sbr.rel (0) target = $region21
    $region20: #{tpu_custom_call.1} parent=1 // pred_region
      _
    $region21: #{tpu_custom_call.1} parent=1 // pred_fallthru
      _
    // Predicated region
    $region22: #{tpu_custom_call.1} parent=1 // pred_check
      _
    $region23: #{tpu_custom_call.1} parent=1 // pred_check_branch
      %54 = sbr.rel (0) target = $region25
    $region24: #{tpu_custom_call.1} parent=1 // pred_region
      %55 = dma.done [#allocation3], 256
    $region25: #{tpu_custom_call.1} parent=1 // pred_fallthru
      _
    // Predicated region
    $region26: #{tpu_custom_call.1} parent=1 // pred_check
      _
    $region27: #{tpu_custom_call.1} parent=1 // pred_check_branch
      %57 = sbr.rel (0) target = $region29
    $region28: #{tpu_custom_call.1} parent=1 // pred_region
      %58 = dma.done [#allocation6], 3072
    $region29: #{tpu_custom_call.1} parent=1 // pred_fallthru
      _
    // Predicated region
    $region30: #{tpu_custom_call.1} parent=1 // pred_check
      _
    $region31: #{tpu_custom_call.1} parent=1 // pred_check_branch
      %60 = sbr.rel (0) target = $region33
    $region32: #{tpu_custom_call.1} parent=1 // pred_region
      %61 = dma.done [#allocation6], 1024
    $region33: #{tpu_custom_call.1} parent=1 // pred_fallthru
      _
    %v63 = vld [vmem:[#allocation2] sm:$0xff]
    %v64 = vld [vmem:[#allocation2 + $0x8] sm:$0xff]
    %v65 = vpack.c.bf16 %v64, %v63
    %v66 = vld [vmem:[#allocation5] sm:$0xff]
    %v67 = vld [vmem:[#allocation5 + $0x8] sm:$0xf]
    %v68 = vld [vmem:[#allocation5 + $0xc] sm:$0xff]
    %v69 = vld [vmem:[#allocation5 + $0x14] sm:$0xf]
    %v70 = vld [vmem:[#allocation5 + $0x18] sm:$0xff]
    %v71 = vld [vmem:[#allocation5 + $0x20] sm:$0xf]
    %v72 = vld [vmem:[#allocation5 + $0x24] sm:$0xff]
    %v73 = vld [vmem:[#allocation5 + $0x2c] sm:$0xf]
    %v74 = vld [vmem:[#allocation5 + $0x30] sm:$0xff]
    %v75 = vld [vmem:[#allocation5 + $0x38] sm:$0xf]
    %v76 = vld [vmem:[#allocation5 + $0x3c] sm:$0xff]
    %v77 = vld [vmem:[#allocation5 + $0x44] sm:$0xf]
    %v78 = vld [vmem:[#allocation5 + $0x48] sm:$0xff]
    %v79 = vld [vmem:[#allocation5 + $0x50] sm:$0xf]
    %v80 = vld [vmem:[#allocation5 + $0x54] sm:$0xff]
    %v81 = vld [vmem:[#allocation5 + $0x5c] sm:$0xf]
    %v82 = vld [vmem:[#allocation5 + $0x60] sm:$0xff]
    %v83 = vld [vmem:[#allocation5 + $0x68] sm:$0xf]
    %v84 = vld [vmem:[#allocation5 + $0x6c] sm:$0xff]
    %v85 = vld [vmem:[#allocation5 + $0x74] sm:$0xf]
    %v86 = vld [vmem:[#allocation5 + $0x78] sm:$0xff]
    %v87 = vld [vmem:[#allocation5 + $0x80] sm:$0xf]
    %v88 = vld [vmem:[#allocation5 + $0x84] sm:$0xff]
    %v89 = vld [vmem:[#allocation5 + $0x8c] sm:$0xf]
    %v90 = vld [vmem:[#allocation5 + $0x90] sm:$0xff]
    %v91 = vld [vmem:[#allocation5 + $0x98] sm:$0xf]
    %v92 = vld [vmem:[#allocation5 + $0x9c] sm:$0xff]
    %v93 = vld [vmem:[#allocation5 + $0xa4] sm:$0xf]
    %v94 = vld [vmem:[#allocation5 + $0xa8] sm:$0xff]
    %v95 = vld [vmem:[#allocation5 + $0xb0] sm:$0xf]
    %v96 = vld [vmem:[#allocation5 + $0xb4] sm:$0xff]
    %v97 = vld [vmem:[#allocation5 + $0xbc] sm:$0xf]
    %v98 = vld [vmem:[%s2] sm:$0x7]
    %v100 = vlaneseq
    %v101 = vshrl.u32 %v100, 7
    %v102 = vsub.s32 0, %v101
    %v103 = vrot.slane %v98, %v102
    %v104 = vlaneseq
    %v105 = vshrl.u32 %v104, 7
    %v106 = vsub.s32 1, %v105
    %v107 = vrot.slane %v98, %v106
    %v108 = vlaneseq
    %v109 = vshrl.u32 %v108, 7
    %v110 = vsub.s32 2, %v109
    %v111 = vrot.slane %v98, %v110
    %v147 = vunpack.c.l.b16 %v66
    %v148 = vunpack.c.h.b16 %v66
    %v149 = vunpack.c.l.b16 %v67
    %v150 = vunpack.c.l.b16 %v68
    %v151 = vunpack.c.h.b16 %v68
    %v152 = vunpack.c.l.b16 %v69
    %v153 = vunpack.c.l.b16 %v70
    %v154 = vunpack.c.h.b16 %v70
    %v155 = vunpack.c.l.b16 %v71
    %v156 = vunpack.c.l.b16 %v72
    %v157 = vunpack.c.h.b16 %v72
    %v158 = vunpack.c.l.b16 %v73
    %v159 = vunpack.c.l.b16 %v74
    %v160 = vunpack.c.h.b16 %v74
    %v161 = vunpack.c.l.b16 %v75
    %v162 = vunpack.c.l.b16 %v76
    %v163 = vunpack.c.h.b16 %v76
    %v164 = vunpack.c.l.b16 %v77
    %v165 = vunpack.c.l.b16 %v78
    %v166 = vunpack.c.h.b16 %v78
    %v167 = vunpack.c.l.b16 %v79
    %v168 = vunpack.c.l.b16 %v80
    %v169 = vunpack.c.h.b16 %v80
    %v170 = vunpack.c.l.b16 %v81
    %v171 = vunpack.c.l.b16 %v82
    %v172 = vunpack.c.h.b16 %v82
    %v173 = vunpack.c.l.b16 %v83
    %v174 = vunpack.c.l.b16 %v84
    %v175 = vunpack.c.h.b16 %v84
    %v176 = vunpack.c.l.b16 %v85
    %v177 = vunpack.c.l.b16 %v86
    %v178 = vunpack.c.h.b16 %v86
    %v179 = vunpack.c.l.b16 %v87
    %v180 = vunpack.c.l.b16 %v88
    %v181 = vunpack.c.h.b16 %v88
    %v182 = vunpack.c.l.b16 %v89
    %v183 = vunpack.c.l.b16 %v90
    %v184 = vunpack.c.h.b16 %v90
    %v185 = vunpack.c.l.b16 %v91
    %v186 = vunpack.c.l.b16 %v92
    %v187 = vunpack.c.h.b16 %v92
    %v188 = vunpack.c.l.b16 %v93
    %v189 = vunpack.c.l.b16 %v94
    %v190 = vunpack.c.h.b16 %v94
    %v191 = vunpack.c.l.b16 %v95
    %v192 = vunpack.c.l.b16 %v96
    %v193 = vunpack.c.h.b16 %v96
    %v194 = vunpack.c.l.b16 %v97
    %v195 = vpack.c.b16 %v150, %v147
    %v196 = vpack.c.b16 %v151, %v148
    %v197 = vpack.c.b16 %v152, %v149
    %v198 = vpack.c.b16 %v156, %v153
    %v199 = vpack.c.b16 %v157, %v154
    %v200 = vpack.c.b16 %v158, %v155
    %v201 = vpack.c.b16 %v162, %v159
    %v202 = vpack.c.b16 %v163, %v160
    %v203 = vpack.c.b16 %v164, %v161
    %v204 = vpack.c.b16 %v168, %v165
    %v205 = vpack.c.b16 %v169, %v166
    %v206 = vpack.c.b16 %v170, %v167
    %v207 = vpack.c.b16 %v174, %v171
    %v208 = vpack.c.b16 %v175, %v172
    %v209 = vpack.c.b16 %v176, %v173
    %v210 = vpack.c.b16 %v180, %v177
    %v211 = vpack.c.b16 %v181, %v178
    %v212 = vpack.c.b16 %v182, %v179
    %v213 = vpack.c.b16 %v186, %v183
    %v214 = vpack.c.b16 %v187, %v184
    %v215 = vpack.c.b16 %v188, %v185
    %v216 = vpack.c.b16 %v192, %v189
    %v217 = vpack.c.b16 %v193, %v190
    %v218 = vpack.c.b16 %v194, %v191
    %243 = vmatprep.subr.bf16.mxu0 %v217
    %244 = vmatpush1.bf16.msra.mxu0 %v216
    %245 = vmatprep.subr.bf16.mxu0 %v214
    %246 = vmatpush1.bf16.msra.mxu0 %v213
    %247 = vmatprep.subr.bf16.mxu0 %v211
    %248 = vmatpush1.bf16.msra.mxu0 %v210
    %249 = vmatprep.subr.bf16.mxu0 %v208
    %250 = vmatpush1.bf16.msra.mxu0 %v207
    %251 = vmatprep.subr.bf16.mxu0 %v205
    %252 = vmatpush1.bf16.msra.mxu0 %v204
    %253 = vmatprep.subr.bf16.mxu0 %v202
    %254 = vmatpush1.bf16.msra.mxu0 %v201
    %255 = vmatprep.subr.bf16.mxu0 %v199
    %256 = vmatpush1.bf16.msra.mxu0 %v198
    %257 = vmatprep.subr.bf16.mxu0 %v196
    %258 = vmatpush1.bf16.msra.mxu0 %v195
    %259 = vmatprep.subr.bf16.mxu0 0
    %260 = vmatpush2.bf16.msra.mxu0 0
    %261 = vmatprep.subr.bf16.mxu0 0
    %262 = vmatpush2.bf16.msra.mxu0 0
    %263 = vmatprep.subr.bf16.mxu0 0
    %264 = vmatpush2.bf16.msra.mxu0 0
    %265 = vmatprep.subr.bf16.mxu0 0
    %266 = vmatpush2.bf16.msra.mxu0 0
    %267 = vmatprep.subr.bf16.mxu0 0
    %268 = vmatpush2.bf16.msra.mxu0 0
    %269 = vmatprep.subr.bf16.mxu0 0
    %270 = vmatpush2.bf16.msra.mxu0 0
    %271 = vmatprep.subr.bf16.mxu0 0
    %272 = vmatpush2.bf16.msra.mxu0 0
    %273 = vmatprep.subr.bf16.mxu0 0
    %274 = vmatpush2.bf16.msra.mxu0 0
    %275 = vmatprep.mubr.bf16.mxu0 0
    %276 = vmatmul.mubr.bf16.gmra.mxu0 %v65
    %v277 = vpop.f32.mrf.mxu0
    %v278 = vadd.f32 %v103, %v277
    %v279 = vpop.f32.mrf.mxu0
    %v280 = vadd.f32 %v107, %v279
    %v281 = vpop.f32.mrf.mxu0
    %v282 = vadd.f32 %v103, %v281
    %v283 = vpop.f32.mrf.mxu0
    %v284 = vadd.f32 %v107, %v283
    %285 = vdwg.mxu0
    %286 = vmatprep.subr.bf16.mxu0 0
    %287 = vmatpush1.bf16.msra.mxu0 %v218
    %288 = vmatprep.subr.bf16.mxu0 0
    %289 = vmatpush1.bf16.msra.mxu0 %v215
    %290 = vmatprep.subr.bf16.mxu0 0
    %291 = vmatpush1.bf16.msra.mxu0 %v212
    %292 = vmatprep.subr.bf16.mxu0 0
    %293 = vmatpush1.bf16.msra.mxu0 %v209
    %294 = vmatprep.subr.bf16.mxu0 0
    %295 = vmatpush1.bf16.msra.mxu0 %v206
    %296 = vmatprep.subr.bf16.mxu0 0
    %297 = vmatpush1.bf16.msra.mxu0 %v203
    %298 = vmatprep.subr.bf16.mxu0 0
    %299 = vmatpush1.bf16.msra.mxu0 %v200
    %300 = vmatprep.subr.bf16.mxu0 0
    %301 = vmatpush1.bf16.msra.mxu0 %v197
    %302 = vmatprep.subr.bf16.mxu0 0
    %303 = vmatpush2.bf16.msra.mxu0 0
    %304 = vmatprep.subr.bf16.mxu0 0
    %305 = vmatpush2.bf16.msra.mxu0 0
    %306 = vmatprep.subr.bf16.mxu0 0
    %307 = vmatpush2.bf16.msra.mxu0 0
    %308 = vmatprep.subr.bf16.mxu0 0
    %309 = vmatpush2.bf16.msra.mxu0 0
    %310 = vmatprep.subr.bf16.mxu0 0
    %311 = vmatpush2.bf16.msra.mxu0 0
    %312 = vmatprep.subr.bf16.mxu0 0
    %313 = vmatpush2.bf16.msra.mxu0 0
    %314 = vmatprep.subr.bf16.mxu0 0
    %315 = vmatpush2.bf16.msra.mxu0 0
    %316 = vmatprep.subr.bf16.mxu0 0
    %317 = vmatpush2.bf16.msra.mxu0 0
    %318 = vmatprep.mubr.bf16.mxu0 0
    %319 = vmatmul.mubr.bf16.gmra.mxu0 %v65
    %v320 = vpop.f32.mrf.mxu0
    %v321 = vadd.f32 %v111, %v320
    %v322 = vpop.f32.mrf.mxu0
    %v323 = vpop.f32.mrf.mxu0
    %v324 = vadd.f32 %v111, %v323
    %v325 = vpop.f32.mrf.mxu0
    %326 = vdwg.mxu0
    %v327 = vmul.f32 %v278, 0.17677669
    %v328 = vmul.f32 %v282, 0.17677669
    %v329 = vpack.c.bf16 %v327, %v327
    %v330 = vpack.c.bf16 %v328, %v328
    %v331 = vpack.c.bf16 %v280, %v280
    %v332 = vpack.c.bf16 %v284, %v284
    %v333 = vpack.c.bf16 %v321, %v321
    %v334 = vpack.c.bf16 %v324, %v324
    %vm335 = vcmask 261120
    %v337 = vsel %vm335, %v329, 0
    %v340 = vsel %vm335, %v331, 0
    %342 = vmatprep.subr.bf16.mxu0 0
    %343 = vmatpush1.bf16.xpose.msra.mxu0 0
    %344 = vmatprep.subr.bf16.mxu0 0
    %345 = vmatpush1.bf16.xpose.msra.mxu0 0
    %346 = vmatprep.subr.bf16.mxu0 0
    %347 = vmatpush1.bf16.xpose.msra.mxu0 0
    %348 = vmatprep.subr.bf16.mxu0 0
    %349 = vmatpush1.bf16.xpose.msra.mxu0 0
    %350 = vmatprep.subr.bf16.mxu0 0
    %351 = vmatpush1.bf16.xpose.msra.mxu0 0
    %352 = vmatprep.subr.bf16.mxu0 0
    %353 = vmatpush1.bf16.xpose.msra.mxu0 0
    %354 = vmatprep.subr.bf16.mxu0 0
    %355 = vmatpush1.bf16.xpose.msra.mxu0 0
    %356 = vmatprep.subr.bf16.mxu0 0
    %357 = vmatpush1.bf16.xpose.msra.mxu0 %v340
    %358 = vmatprep.subr.bf16.mxu0 0
    %359 = vmatpush2.bf16.xpose.msra.mxu0 0
    %360 = vmatprep.subr.bf16.mxu0 0
    %361 = vmatpush2.bf16.xpose.msra.mxu0 0
    %362 = vmatprep.subr.bf16.mxu0 0
    %363 = vmatpush2.bf16.xpose.msra.mxu0 0
    %364 = vmatprep.subr.bf16.mxu0 0
    %365 = vmatpush2.bf16.xpose.msra.mxu0 0
    %366 = vmatprep.subr.bf16.mxu0 0
    %367 = vmatpush2.bf16.xpose.msra.mxu0 0
    %368 = vmatprep.subr.bf16.mxu0 0
    %369 = vmatpush2.bf16.xpose.msra.mxu0 0
    %370 = vmatprep.subr.bf16.mxu0 0
    %371 = vmatpush2.bf16.xpose.msra.mxu0 0
    %372 = vmatprep.subr.bf16.mxu0 0
    %373 = vmatpush2.bf16.xpose.msra.mxu0 0
    %374 = vmatprep.mubr.bf16.mxu0 0
    %375 = vmatmul.mubr.bf16.gmra.mxu0 %v337
    %v376 = vpop.f32.mrf.mxu0
    %v377 = vadd.f32 0.0, %v376
    %v378 = vpop.f32.mrf.mxu0
    %v379 = vpop.f32.mrf.mxu0
    %v380 = vpop.f32.mrf.mxu0
    %381 = vdwg.mxu0
    %v383 = vsel %vm335, %v330, 0
    %v386 = vsel %vm335, %v332, 0
    %388 = vmatprep.subr.bf16.mxu0 0
    %389 = vmatpush1.bf16.xpose.msra.mxu0 0
    %390 = vmatprep.subr.bf16.mxu0 0
    %391 = vmatpush1.bf16.xpose.msra.mxu0 0
    %392 = vmatprep.subr.bf16.mxu0 0
    %393 = vmatpush1.bf16.xpose.msra.mxu0 0
    %394 = vmatprep.subr.bf16.mxu0 0
    %395 = vmatpush1.bf16.xpose.msra.mxu0 0
    %396 = vmatprep.subr.bf16.mxu0 0
    %397 = vmatpush1.bf16.xpose.msra.mxu0 0
    %398 = vmatprep.subr.bf16.mxu0 0
    %399 = vmatpush1.bf16.xpose.msra.mxu0 0
    %400 = vmatprep.subr.bf16.mxu0 0
    %401 = vmatpush1.bf16.xpose.msra.mxu0 0
    %402 = vmatprep.subr.bf16.mxu0 0
    %403 = vmatpush1.bf16.xpose.msra.mxu0 %v386
    %404 = vmatprep.subr.bf16.mxu0 0
    %405 = vmatpush2.bf16.xpose.msra.mxu0 0
    %406 = vmatprep.subr.bf16.mxu0 0
    %407 = vmatpush2.bf16.xpose.msra.mxu0 0
    %408 = vmatprep.subr.bf16.mxu0 0
    %409 = vmatpush2.bf16.xpose.msra.mxu0 0
    %410 = vmatprep.subr.bf16.mxu0 0
    %411 = vmatpush2.bf16.xpose.msra.mxu0 0
    %412 = vmatprep.subr.bf16.mxu0 0
    %413 = vmatpush2.bf16.xpose.msra.mxu0 0
    %414 = vmatprep.subr.bf16.mxu0 0
    %415 = vmatpush2.bf16.xpose.msra.mxu0 0
    %416 = vmatprep.subr.bf16.mxu0 0
    %417 = vmatpush2.bf16.xpose.msra.mxu0 0
    %418 = vmatprep.subr.bf16.mxu0 0
    %419 = vmatpush2.bf16.xpose.msra.mxu0 0
    %420 = vmatprep.mubr.bf16.mxu0 0
    %421 = vmatmul.mubr.bf16.gmra.mxu0 %v383
    %v422 = vpop.f32.mrf.mxu0
    %v423 = vadd.f32 0.0, %v422
    %v424 = vpop.f32.mrf.mxu0
    %v425 = vpop.f32.mrf.mxu0
    %v426 = vpop.f32.mrf.mxu0
    %427 = vdwg.mxu0
    %vm428 = vcmask 64512
    %v429 = vsel %vm428, %v377, -inf
    %430 = vmax.xlane.f32.xlu0 %v429
    %v431 = vpop.xlane.xlu0 %430
    %v432 = vsel %vm428, %v423, -inf
    %433 = vmax.xlane.f32.xlu0 %v432
    %v434 = vpop.xlane.xlu0 %433
    %v435 = vsub.f32 %v377, %v431
    %v436 = vsub.f32 %v423, %v434
    %v437 = vmul.f32 %v435, 1.442695
    %v438 = vpow.pop %v437
    %v439 = vmul.f32 %v436, 1.442695
    %v440 = vpow.pop %v439
    %v441 = vsel %vm428, %v438, 0.0
    %442 = vadd.xlane.f32.xlu0 %v441
    %v443 = vpop.xlane.xlu0 %442
    %v444 = vsel %vm428, %v440, 0.0
    %445 = vadd.xlane.f32.xlu0 %v444
    %v446 = vpop.xlane.xlu0 %445
    %v447 = vpack.c.bf16 %v438, %v438
    %v448 = vpack.c.bf16 %v440, %v440
    %v450 = vsel %vm428, %v447, 0
    %vm452 = vcmask 1043456
    %v454 = vsel %vm452, %v333, 0
    %456 = vmatprep.subr.bf16.mxu0 0
    %457 = vmatpush1.bf16.msra.mxu0 0
    %458 = vmatprep.subr.bf16.mxu0 0
    %459 = vmatpush1.bf16.msra.mxu0 0
    %460 = vmatprep.subr.bf16.mxu0 0
    %461 = vmatpush1.bf16.msra.mxu0 0
    %462 = vmatprep.subr.bf16.mxu0 0
    %463 = vmatpush1.bf16.msra.mxu0 0
    %464 = vmatprep.subr.bf16.mxu0 0
    %465 = vmatpush1.bf16.msra.mxu0 0
    %466 = vmatprep.subr.bf16.mxu0 0
    %467 = vmatpush1.bf16.msra.mxu0 0
    %468 = vmatprep.subr.bf16.mxu0 0
    %469 = vmatpush1.bf16.msra.mxu0 0
    %470 = vmatprep.subr.bf16.mxu0 0
    %471 = vmatpush1.bf16.msra.mxu0 %v454
    %472 = vmatprep.subr.bf16.mxu0 0
    %473 = vmatpush2.bf16.msra.mxu0 0
    %474 = vmatprep.subr.bf16.mxu0 0
    %475 = vmatpush2.bf16.msra.mxu0 0
    %476 = vmatprep.subr.bf16.mxu0 0
    %477 = vmatpush2.bf16.msra.mxu0 0
    %478 = vmatprep.subr.bf16.mxu0 0
    %479 = vmatpush2.bf16.msra.mxu0 0
    %480 = vmatprep.subr.bf16.mxu0 0
    %481 = vmatpush2.bf16.msra.mxu0 0
    %482 = vmatprep.subr.bf16.mxu0 0
    %483 = vmatpush2.bf16.msra.mxu0 0
    %484 = vmatprep.subr.bf16.mxu0 0
    %485 = vmatpush2.bf16.msra.mxu0 0
    %486 = vmatprep.subr.bf16.mxu0 0
    %487 = vmatpush2.bf16.msra.mxu0 0
    %488 = vmatprep.mubr.bf16.mxu0 0
    %489 = vmatmul.mubr.bf16.gmra.mxu0 %v450
    %v490 = vpop.f32.mrf.mxu0
    %v491 = vadd.f32 0.0, %v490
    %v492 = vpop.f32.mrf.mxu0
    %v493 = vpop.f32.mrf.mxu0
    %v494 = vpop.f32.mrf.mxu0
    %495 = vdwg.mxu0
    %v497 = vsel %vm428, %v448, 0
    %v500 = vsel %vm452, %v334, 0
    %502 = vmatprep.subr.bf16.mxu0 0
    %503 = vmatpush1.bf16.msra.mxu0 0
    %504 = vmatprep.subr.bf16.mxu0 0
    %505 = vmatpush1.bf16.msra.mxu0 0
    %506 = vmatprep.subr.bf16.mxu0 0
    %507 = vmatpush1.bf16.msra.mxu0 0
    %508 = vmatprep.subr.bf16.mxu0 0
    %509 = vmatpush1.bf16.msra.mxu0 0
    %510 = vmatprep.subr.bf16.mxu0 0
    %511 = vmatpush1.bf16.msra.mxu0 0
    %512 = vmatprep.subr.bf16.mxu0 0
    %513 = vmatpush1.bf16.msra.mxu0 0
    %514 = vmatprep.subr.bf16.mxu0 0
    %515 = vmatpush1.bf16.msra.mxu0 0
    %516 = vmatprep.subr.bf16.mxu0 0
    %517 = vmatpush1.bf16.msra.mxu0 %v500
    %518 = vmatprep.subr.bf16.mxu0 0
    %519 = vmatpush2.bf16.msra.mxu0 0
    %520 = vmatprep.subr.bf16.mxu0 0
    %521 = vmatpush2.bf16.msra.mxu0 0
    %522 = vmatprep.subr.bf16.mxu0 0
    %523 = vmatpush2.bf16.msra.mxu0 0
    %524 = vmatprep.subr.bf16.mxu0 0
    %525 = vmatpush2.bf16.msra.mxu0 0
    %526 = vmatprep.subr.bf16.mxu0 0
    %527 = vmatpush2.bf16.msra.mxu0 0
    %528 = vmatprep.subr.bf16.mxu0 0
    %529 = vmatpush2.bf16.msra.mxu0 0
    %530 = vmatprep.subr.bf16.mxu0 0
    %531 = vmatpush2.bf16.msra.mxu0 0
    %532 = vmatprep.subr.bf16.mxu0 0
    %533 = vmatpush2.bf16.msra.mxu0 0
    %534 = vmatprep.mubr.bf16.mxu0 0
    %535 = vmatmul.mubr.bf16.gmra.mxu0 %v497
    %v536 = vpop.f32.mrf.mxu0
    %v537 = vadd.f32 0.0, %v536
    %v538 = vpop.f32.mrf.mxu0
    %v539 = vpop.f32.mrf.mxu0
    %v540 = vpop.f32.mrf.mxu0
    %541 = vdwg.mxu0
    %v542 = vrcp.pop %v443
    %v543 = vrcp.pop %v446
    %v544 = vmul.f32 %v491, %v542
    %v545 = vmul.f32 %v537, %v543
    %547 = vrot.lane.b32.xlu0 %v329, 96
    %v548 = vpop.permute.xlu0 %547
    %550 = vrot.lane.b32.xlu0 %v331, 96
    %v551 = vpop.permute.xlu0 %550
    %v553 = vsel %vm335, %v548, 0
    %v556 = vsel %vm335, %v551, 0
    %558 = vmatprep.subr.bf16.mxu0 0
    %559 = vmatpush1.bf16.xpose.msra.mxu0 0
    %560 = vmatprep.subr.bf16.mxu0 0
    %561 = vmatpush1.bf16.xpose.msra.mxu0 0
    %562 = vmatprep.subr.bf16.mxu0 0
    %563 = vmatpush1.bf16.xpose.msra.mxu0 0
    %564 = vmatprep.subr.bf16.mxu0 0
    %565 = vmatpush1.bf16.xpose.msra.mxu0 0
    %566 = vmatprep.subr.bf16.mxu0 0
    %567 = vmatpush1.bf16.xpose.msra.mxu0 0
    %568 = vmatprep.subr.bf16.mxu0 0
    %569 = vmatpush1.bf16.xpose.msra.mxu0 0
    %570 = vmatprep.subr.bf16.mxu0 0
    %571 = vmatpush1.bf16.xpose.msra.mxu0 0
    %572 = vmatprep.subr.bf16.mxu0 0
    %573 = vmatpush1.bf16.xpose.msra.mxu0 %v556
    %574 = vmatprep.subr.bf16.mxu0 0
    %575 = vmatpush2.bf16.xpose.msra.mxu0 0
    %576 = vmatprep.subr.bf16.mxu0 0
    %577 = vmatpush2.bf16.xpose.msra.mxu0 0
    %578 = vmatprep.subr.bf16.mxu0 0
    %579 = vmatpush2.bf16.xpose.msra.mxu0 0
    %580 = vmatprep.subr.bf16.mxu0 0
    %581 = vmatpush2.bf16.xpose.msra.mxu0 0
    %582 = vmatprep.subr.bf16.mxu0 0
    %583 = vmatpush2.bf16.xpose.msra.mxu0 0
    %584 = vmatprep.subr.bf16.mxu0 0
    %585 = vmatpush2.bf16.xpose.msra.mxu0 0
    %586 = vmatprep.subr.bf16.mxu0 0
    %587 = vmatpush2.bf16.xpose.msra.mxu0 0
    %588 = vmatprep.subr.bf16.mxu0 0
    %589 = vmatpush2.bf16.xpose.msra.mxu0 0
    %590 = vmatprep.mubr.bf16.mxu0 0
    %591 = vmatmul.mubr.bf16.gmra.mxu0 %v553
    %v592 = vpop.f32.mrf.mxu0
    %v593 = vadd.f32 0.0, %v592
    %v594 = vpop.f32.mrf.mxu0
    %v595 = vpop.f32.mrf.mxu0
    %v596 = vpop.f32.mrf.mxu0
    %597 = vdwg.mxu0
    %599 = vrot.lane.b32.xlu0 %v330, 96
    %v600 = vpop.permute.xlu0 %599
    %602 = vrot.lane.b32.xlu0 %v332, 96
    %v603 = vpop.permute.xlu0 %602
    %v605 = vsel %vm335, %v600, 0
    %v608 = vsel %vm335, %v603, 0
    %610 = vmatprep.subr.bf16.mxu0 0
    %611 = vmatpush1.bf16.xpose.msra.mxu0 0
    %612 = vmatprep.subr.bf16.mxu0 0
    %613 = vmatpush1.bf16.xpose.msra.mxu0 0
    %614 = vmatprep.subr.bf16.mxu0 0
    %615 = vmatpush1.bf16.xpose.msra.mxu0 0
    %616 = vmatprep.subr.bf16.mxu0 0
    %617 = vmatpush1.bf16.xpose.msra.mxu0 0
    %618 = vmatprep.subr.bf16.mxu0 0
    %619 = vmatpush1.bf16.xpose.msra.mxu0 0
    %620 = vmatprep.subr.bf16.mxu0 0
    %621 = vmatpush1.bf16.xpose.msra.mxu0 0
    %622 = vmatprep.subr.bf16.mxu0 0
    %623 = vmatpush1.bf16.xpose.msra.mxu0 0
    %624 = vmatprep.subr.bf16.mxu0 0
    %625 = vmatpush1.bf16.xpose.msra.mxu0 %v608
    %626 = vmatprep.subr.bf16.mxu0 0
    %627 = vmatpush2.bf16.xpose.msra.mxu0 0
    %628 = vmatprep.subr.bf16.mxu0 0
    %629 = vmatpush2.bf16.xpose.msra.mxu0 0
    %630 = vmatprep.subr.bf16.mxu0 0
    %631 = vmatpush2.bf16.xpose.msra.mxu0 0
    %632 = vmatprep.subr.bf16.mxu0 0
    %633 = vmatpush2.bf16.xpose.msra.mxu0 0
    %634 = vmatprep.subr.bf16.mxu0 0
    %635 = vmatpush2.bf16.xpose.msra.mxu0 0
    %636 = vmatprep.subr.bf16.mxu0 0
    %637 = vmatpush2.bf16.xpose.msra.mxu0 0
    %638 = vmatprep.subr.bf16.mxu0 0
    %639 = vmatpush2.bf16.xpose.msra.mxu0 0
    %640 = vmatprep.subr.bf16.mxu0 0
    %641 = vmatpush2.bf16.xpose.msra.mxu0 0
    %642 = vmatprep.mubr.bf16.mxu0 0
    %643 = vmatmul.mubr.bf16.gmra.mxu0 %v605
    %v644 = vpop.f32.mrf.mxu0
    %v645 = vadd.f32 0.0, %v644
    %v646 = vpop.f32.mrf.mxu0
    %v647 = vpop.f32.mrf.mxu0
    %v648 = vpop.f32.mrf.mxu0
    %649 = vdwg.mxu0
    %v650 = vsel %vm428, %v593, -inf
    %651 = vmax.xlane.f32.xlu0 %v650
    %v652 = vpop.xlane.xlu0 %651
    %v653 = vsel %vm428, %v645, -inf
    %654 = vmax.xlane.f32.xlu0 %v653
    %v655 = vpop.xlane.xlu0 %654
    %v656 = vsub.f32 %v593, %v652
    %v657 = vsub.f32 %v645, %v655
    %v658 = vmul.f32 %v656, 1.442695
    %v659 = vpow.pop %v658
    %v660 = vmul.f32 %v657, 1.442695
    %v661 = vpow.pop %v660
    %v662 = vsel %vm428, %v659, 0.0
    %663 = vadd.xlane.f32.xlu0 %v662
    %v664 = vpop.xlane.xlu0 %663
    %v665 = vsel %vm428, %v661, 0.0
    %666 = vadd.xlane.f32.xlu0 %v665
    %v667 = vpop.xlane.xlu0 %666
    %v668 = vpack.c.bf16 %v659, %v659
    %v669 = vpack.c.bf16 %v661, %v661
    %671 = vrot.lane.b32.xlu0 %v333, 96
    %v672 = vpop.permute.xlu0 %671
    %v674 = vsel %vm428, %v668, 0
    %v677 = vsel %vm452, %v672, 0
    %679 = vmatprep.subr.bf16.mxu0 0
    %680 = vmatpush1.bf16.msra.mxu0 0
    %681 = vmatprep.subr.bf16.mxu0 0
    %682 = vmatpush1.bf16.msra.mxu0 0
    %683 = vmatprep.subr.bf16.mxu0 0
    %684 = vmatpush1.bf16.msra.mxu0 0
    %685 = vmatprep.subr.bf16.mxu0 0
    %686 = vmatpush1.bf16.msra.mxu0 0
    %687 = vmatprep.subr.bf16.mxu0 0
    %688 = vmatpush1.bf16.msra.mxu0 0
    %689 = vmatprep.subr.bf16.mxu0 0
    %690 = vmatpush1.bf16.msra.mxu0 0
    %691 = vmatprep.subr.bf16.mxu0 0
    %692 = vmatpush1.bf16.msra.mxu0 0
    %693 = vmatprep.subr.bf16.mxu0 0
    %694 = vmatpush1.bf16.msra.mxu0 %v677
    %695 = vmatprep.subr.bf16.mxu0 0
    %696 = vmatpush2.bf16.msra.mxu0 0
    %697 = vmatprep.subr.bf16.mxu0 0
    %698 = vmatpush2.bf16.msra.mxu0 0
    %699 = vmatprep.subr.bf16.mxu0 0
    %700 = vmatpush2.bf16.msra.mxu0 0
    %701 = vmatprep.subr.bf16.mxu0 0
    %702 = vmatpush2.bf16.msra.mxu0 0
    %703 = vmatprep.subr.bf16.mxu0 0
    %704 = vmatpush2.bf16.msra.mxu0 0
    %705 = vmatprep.subr.bf16.mxu0 0
    %706 = vmatpush2.bf16.msra.mxu0 0
    %707 = vmatprep.subr.bf16.mxu0 0
    %708 = vmatpush2.bf16.msra.mxu0 0
    %709 = vmatprep.subr.bf16.mxu0 0
    %710 = vmatpush2.bf16.msra.mxu0 0
    %711 = vmatprep.mubr.bf16.mxu0 0
    %712 = vmatmul.mubr.bf16.gmra.mxu0 %v674
    %v713 = vpop.f32.mrf.mxu0
    %v714 = vadd.f32 0.0, %v713
    %v715 = vpop.f32.mrf.mxu0
    %v716 = vpop.f32.mrf.mxu0
    %v717 = vpop.f32.mrf.mxu0
    %718 = vdwg.mxu0
    %720 = vrot.lane.b32.xlu0 %v334, 96
    %v721 = vpop.permute.xlu0 %720
    %v723 = vsel %vm428, %v669, 0
    %v726 = vsel %vm452, %v721, 0
    %728 = vmatprep.subr.bf16.mxu0 0
    %729 = vmatpush1.bf16.msra.mxu0 0
    %730 = vmatprep.subr.bf16.mxu0 0
    %731 = vmatpush1.bf16.msra.mxu0 0
    %732 = vmatprep.subr.bf16.mxu0 0
    %733 = vmatpush1.bf16.msra.mxu0 0
    %734 = vmatprep.subr.bf16.mxu0 0
    %735 = vmatpush1.bf16.msra.mxu0 0
    %736 = vmatprep.subr.bf16.mxu0 0
    %737 = vmatpush1.bf16.msra.mxu0 0
    %738 = vmatprep.subr.bf16.mxu0 0
    %739 = vmatpush1.bf16.msra.mxu0 0
    %740 = vmatprep.subr.bf16.mxu0 0
    %741 = vmatpush1.bf16.msra.mxu0 0
    %742 = vmatprep.subr.bf16.mxu0 0
    %743 = vmatpush1.bf16.msra.mxu0 %v726
    %744 = vmatprep.subr.bf16.mxu0 0
    %745 = vmatpush2.bf16.msra.mxu0 0
    %746 = vmatprep.subr.bf16.mxu0 0
    %747 = vmatpush2.bf16.msra.mxu0 0
    %748 = vmatprep.subr.bf16.mxu0 0
    %749 = vmatpush2.bf16.msra.mxu0 0
    %750 = vmatprep.subr.bf16.mxu0 0
    %751 = vmatpush2.bf16.msra.mxu0 0
    %752 = vmatprep.subr.bf16.mxu0 0
    %753 = vmatpush2.bf16.msra.mxu0 0
    %754 = vmatprep.subr.bf16.mxu0 0
    %755 = vmatpush2.bf16.msra.mxu0 0
    %756 = vmatprep.subr.bf16.mxu0 0
    %757 = vmatpush2.bf16.msra.mxu0 0
    %758 = vmatprep.subr.bf16.mxu0 0
    %759 = vmatpush2.bf16.msra.mxu0 0
    %760 = vmatprep.mubr.bf16.mxu0 0
    %761 = vmatmul.mubr.bf16.gmra.mxu0 %v723
    %v762 = vpop.f32.mrf.mxu0
    %v763 = vadd.f32 0.0, %v762
    %v764 = vpop.f32.mrf.mxu0
    %v765 = vpop.f32.mrf.mxu0
    %v766 = vpop.f32.mrf.mxu0
    %767 = vdwg.mxu0
    %v768 = vrcp.pop %v664
    %v769 = vrcp.pop %v667
    %v770 = vmul.f32 %v714, %v768
    %v771 = vmul.f32 %v763, %v769
    %772 = vrot.lane.b32.xlu0 %v329, 64
    %v773 = vpop.permute.xlu0 %772
    %774 = vrot.lane.b32.xlu0 %v331, 64
    %v775 = vpop.permute.xlu0 %774
    %v777 = vsel %vm335, %v773, 0
    %v780 = vsel %vm335, %v775, 0
    %782 = vmatprep.subr.bf16.mxu0 0
    %783 = vmatpush1.bf16.xpose.msra.mxu0 0
    %784 = vmatprep.subr.bf16.mxu0 0
    %785 = vmatpush1.bf16.xpose.msra.mxu0 0
    %786 = vmatprep.subr.bf16.mxu0 0
    %787 = vmatpush1.bf16.xpose.msra.mxu0 0
    %788 = vmatprep.subr.bf16.mxu0 0
    %789 = vmatpush1.bf16.xpose.msra.mxu0 0
    %790 = vmatprep.subr.bf16.mxu0 0
    %791 = vmatpush1.bf16.xpose.msra.mxu0 0
    %792 = vmatprep.subr.bf16.mxu0 0
    %793 = vmatpush1.bf16.xpose.msra.mxu0 0
    %794 = vmatprep.subr.bf16.mxu0 0
    %795 = vmatpush1.bf16.xpose.msra.mxu0 0
    %796 = vmatprep.subr.bf16.mxu0 0
    %797 = vmatpush1.bf16.xpose.msra.mxu0 %v780
    %798 = vmatprep.subr.bf16.mxu0 0
    %799 = vmatpush2.bf16.xpose.msra.mxu0 0
    %800 = vmatprep.subr.bf16.mxu0 0
    %801 = vmatpush2.bf16.xpose.msra.mxu0 0
    %802 = vmatprep.subr.bf16.mxu0 0
    %803 = vmatpush2.bf16.xpose.msra.mxu0 0
    %804 = vmatprep.subr.bf16.mxu0 0
    %805 = vmatpush2.bf16.xpose.msra.mxu0 0
    %806 = vmatprep.subr.bf16.mxu0 0
    %807 = vmatpush2.bf16.xpose.msra.mxu0 0
    %808 = vmatprep.subr.bf16.mxu0 0
    %809 = vmatpush2.bf16.xpose.msra.mxu0 0
    %810 = vmatprep.subr.bf16.mxu0 0
    %811 = vmatpush2.bf16.xpose.msra.mxu0 0
    %812 = vmatprep.subr.bf16.mxu0 0
    %813 = vmatpush2.bf16.xpose.msra.mxu0 0
    %814 = vmatprep.mubr.bf16.mxu0 0
    %815 = vmatmul.mubr.bf16.gmra.mxu0 %v777
    %v816 = vpop.f32.mrf.mxu0
    %v817 = vadd.f32 0.0, %v816
    %v818 = vpop.f32.mrf.mxu0
    %v819 = vpop.f32.mrf.mxu0
    %v820 = vpop.f32.mrf.mxu0
    %821 = vdwg.mxu0
    %822 = vrot.lane.b32.xlu0 %v330, 64
    %v823 = vpop.permute.xlu0 %822
    %824 = vrot.lane.b32.xlu0 %v332, 64
    %v825 = vpop.permute.xlu0 %824
    %v827 = vsel %vm335, %v823, 0
    %v830 = vsel %vm335, %v825, 0
    %832 = vmatprep.subr.bf16.mxu0 0
    %833 = vmatpush1.bf16.xpose.msra.mxu0 0
    %834 = vmatprep.subr.bf16.mxu0 0
    %835 = vmatpush1.bf16.xpose.msra.mxu0 0
    %836 = vmatprep.subr.bf16.mxu0 0
    %837 = vmatpush1.bf16.xpose.msra.mxu0 0
    %838 = vmatprep.subr.bf16.mxu0 0
    %839 = vmatpush1.bf16.xpose.msra.mxu0 0
    %840 = vmatprep.subr.bf16.mxu0 0
    %841 = vmatpush1.bf16.xpose.msra.mxu0 0
    %842 = vmatprep.subr.bf16.mxu0 0
    %843 = vmatpush1.bf16.xpose.msra.mxu0 0
    %844 = vmatprep.subr.bf16.mxu0 0
    %845 = vmatpush1.bf16.xpose.msra.mxu0 0
    %846 = vmatprep.subr.bf16.mxu0 0
    %847 = vmatpush1.bf16.xpose.msra.mxu0 %v830
    %848 = vmatprep.subr.bf16.mxu0 0
    %849 = vmatpush2.bf16.xpose.msra.mxu0 0
    %850 = vmatprep.subr.bf16.mxu0 0
    %851 = vmatpush2.bf16.xpose.msra.mxu0 0
    %852 = vmatprep.subr.bf16.mxu0 0
    %853 = vmatpush2.bf16.xpose.msra.mxu0 0
    %854 = vmatprep.subr.bf16.mxu0 0
    %855 = vmatpush2.bf16.xpose.msra.mxu0 0
    %856 = vmatprep.subr.bf16.mxu0 0
    %857 = vmatpush2.bf16.xpose.msra.mxu0 0
    %858 = vmatprep.subr.bf16.mxu0 0
    %859 = vmatpush2.bf16.xpose.msra.mxu0 0
    %860 = vmatprep.subr.bf16.mxu0 0
    %861 = vmatpush2.bf16.xpose.msra.mxu0 0
    %862 = vmatprep.subr.bf16.mxu0 0
    %863 = vmatpush2.bf16.xpose.msra.mxu0 0
    %864 = vmatprep.mubr.bf16.mxu0 0
    %865 = vmatmul.mubr.bf16.gmra.mxu0 %v827
    %v866 = vpop.f32.mrf.mxu0
    %v867 = vadd.f32 0.0, %v866
    %v868 = vpop.f32.mrf.mxu0
    %v869 = vpop.f32.mrf.mxu0
    %v870 = vpop.f32.mrf.mxu0
    %871 = vdwg.mxu0
    %v872 = vsel %vm428, %v817, -inf
    %873 = vmax.xlane.f32.xlu0 %v872
    %v874 = vpop.xlane.xlu0 %873
    %v875 = vsel %vm428, %v867, -inf
    %876 = vmax.xlane.f32.xlu0 %v875
    %v877 = vpop.xlane.xlu0 %876
    %v878 = vsub.f32 %v817, %v874
    %v879 = vsub.f32 %v867, %v877
    %v880 = vmul.f32 %v878, 1.442695
    %v881 = vpow.pop %v880
    %v882 = vmul.f32 %v879, 1.442695
    %v883 = vpow.pop %v882
    %v884 = vsel %vm428, %v881, 0.0
    %885 = vadd.xlane.f32.xlu0 %v884
    %v886 = vpop.xlane.xlu0 %885
    %v887 = vsel %vm428, %v883, 0.0
    %888 = vadd.xlane.f32.xlu0 %v887
    %v889 = vpop.xlane.xlu0 %888
    %v890 = vpack.c.bf16 %v881, %v881
    %v891 = vpack.c.bf16 %v883, %v883
    %892 = vrot.lane.b32.xlu0 %v333, 64
    %v893 = vpop.permute.xlu0 %892
    %v895 = vsel %vm428, %v890, 0
    %v898 = vsel %vm452, %v893, 0
    %900 = vmatprep.subr.bf16.mxu0 0
    %901 = vmatpush1.bf16.msra.mxu0 0
    %902 = vmatprep.subr.bf16.mxu0 0
    %903 = vmatpush1.bf16.msra.mxu0 0
    %904 = vmatprep.subr.bf16.mxu0 0
    %905 = vmatpush1.bf16.msra.mxu0 0
    %906 = vmatprep.subr.bf16.mxu0 0
    %907 = vmatpush1.bf16.msra.mxu0 0
    %908 = vmatprep.subr.bf16.mxu0 0
    %909 = vmatpush1.bf16.msra.mxu0 0
    %910 = vmatprep.subr.bf16.mxu0 0
    %911 = vmatpush1.bf16.msra.mxu0 0
    %912 = vmatprep.subr.bf16.mxu0 0
    %913 = vmatpush1.bf16.msra.mxu0 0
    %914 = vmatprep.subr.bf16.mxu0 0
    %915 = vmatpush1.bf16.msra.mxu0 %v898
    %916 = vmatprep.subr.bf16.mxu0 0
    %917 = vmatpush2.bf16.msra.mxu0 0
    %918 = vmatprep.subr.bf16.mxu0 0
    %919 = vmatpush2.bf16.msra.mxu0 0
    %920 = vmatprep.subr.bf16.mxu0 0
    %921 = vmatpush2.bf16.msra.mxu0 0
    %922 = vmatprep.subr.bf16.mxu0 0
    %923 = vmatpush2.bf16.msra.mxu0 0
    %924 = vmatprep.subr.bf16.mxu0 0
    %925 = vmatpush2.bf16.msra.mxu0 0
    %926 = vmatprep.subr.bf16.mxu0 0
    %927 = vmatpush2.bf16.msra.mxu0 0
    %928 = vmatprep.subr.bf16.mxu0 0
    %929 = vmatpush2.bf16.msra.mxu0 0
    %930 = vmatprep.subr.bf16.mxu0 0
    %931 = vmatpush2.bf16.msra.mxu0 0
    %932 = vmatprep.mubr.bf16.mxu0 0
    %933 = vmatmul.mubr.bf16.gmra.mxu0 %v895
    %v934 = vpop.f32.mrf.mxu0
    %v935 = vadd.f32 0.0, %v934
    %v936 = vpop.f32.mrf.mxu0
    %v937 = vpop.f32.mrf.mxu0
    %v938 = vpop.f32.mrf.mxu0
    %939 = vdwg.mxu0
    %940 = vrot.lane.b32.xlu0 %v334, 64
    %v941 = vpop.permute.xlu0 %940
    %v943 = vsel %vm428, %v891, 0
    %v946 = vsel %vm452, %v941, 0
    %948 = vmatprep.subr.bf16.mxu0 0
    %949 = vmatpush1.bf16.msra.mxu0 0
    %950 = vmatprep.subr.bf16.mxu0 0
    %951 = vmatpush1.bf16.msra.mxu0 0
    %952 = vmatprep.subr.bf16.mxu0 0
    %953 = vmatpush1.bf16.msra.mxu0 0
    %954 = vmatprep.subr.bf16.mxu0 0
    %955 = vmatpush1.bf16.msra.mxu0 0
    %956 = vmatprep.subr.bf16.mxu0 0
    %957 = vmatpush1.bf16.msra.mxu0 0
    %958 = vmatprep.subr.bf16.mxu0 0
    %959 = vmatpush1.bf16.msra.mxu0 0
    %960 = vmatprep.subr.bf16.mxu0 0
    %961 = vmatpush1.bf16.msra.mxu0 0
    %962 = vmatprep.subr.bf16.mxu0 0
    %963 = vmatpush1.bf16.msra.mxu0 %v946
    %964 = vmatprep.subr.bf16.mxu0 0
    %965 = vmatpush2.bf16.msra.mxu0 0
    %966 = vmatprep.subr.bf16.mxu0 0
    %967 = vmatpush2.bf16.msra.mxu0 0
    %968 = vmatprep.subr.bf16.mxu0 0
    %969 = vmatpush2.bf16.msra.mxu0 0
    %970 = vmatprep.subr.bf16.mxu0 0
    %971 = vmatpush2.bf16.msra.mxu0 0
    %972 = vmatprep.subr.bf16.mxu0 0
    %973 = vmatpush2.bf16.msra.mxu0 0
    %974 = vmatprep.subr.bf16.mxu0 0
    %975 = vmatpush2.bf16.msra.mxu0 0
    %976 = vmatprep.subr.bf16.mxu0 0
    %977 = vmatpush2.bf16.msra.mxu0 0
    %978 = vmatprep.subr.bf16.mxu0 0
    %979 = vmatpush2.bf16.msra.mxu0 0
    %980 = vmatprep.mubr.bf16.mxu0 0
    %981 = vmatmul.mubr.bf16.gmra.mxu0 %v943
    %v982 = vpop.f32.mrf.mxu0
    %v983 = vadd.f32 0.0, %v982
    %v984 = vpop.f32.mrf.mxu0
    %v985 = vpop.f32.mrf.mxu0
    %v986 = vpop.f32.mrf.mxu0
    %987 = vdwg.mxu0
    %v988 = vrcp.pop %v886
    %v989 = vrcp.pop %v889
    %v990 = vmul.f32 %v935, %v988
    %v991 = vmul.f32 %v983, %v989
    %992 = vrot.lane.b32.xlu0 %v329, 32
    %v993 = vpop.permute.xlu0 %992
    %994 = vrot.lane.b32.xlu0 %v331, 32
    %v995 = vpop.permute.xlu0 %994
    %v997 = vsel %vm335, %v993, 0
    %v1000 = vsel %vm335, %v995, 0
    %1002 = vmatprep.subr.bf16.mxu0 0
    %1003 = vmatpush1.bf16.xpose.msra.mxu0 0
    %1004 = vmatprep.subr.bf16.mxu0 0
    %1005 = vmatpush1.bf16.xpose.msra.mxu0 0
    %1006 = vmatprep.subr.bf16.mxu0 0
    %1007 = vmatpush1.bf16.xpose.msra.mxu0 0
    %1008 = vmatprep.subr.bf16.mxu0 0
    %1009 = vmatpush1.bf16.xpose.msra.mxu0 0
    %1010 = vmatprep.subr.bf16.mxu0 0
    %1011 = vmatpush1.bf16.xpose.msra.mxu0 0
    %1012 = vmatprep.subr.bf16.mxu0 0
    %1013 = vmatpush1.bf16.xpose.msra.mxu0 0
    %1014 = vmatprep.subr.bf16.mxu0 0
    %1015 = vmatpush1.bf16.xpose.msra.mxu0 0
    %1016 = vmatprep.subr.bf16.mxu0 0
    %1017 = vmatpush1.bf16.xpose.msra.mxu0 %v1000
    %1018 = vmatprep.subr.bf16.mxu0 0
    %1019 = vmatpush2.bf16.xpose.msra.mxu0 0
    %1020 = vmatprep.subr.bf16.mxu0 0
    %1021 = vmatpush2.bf16.xpose.msra.mxu0 0
    %1022 = vmatprep.subr.bf16.mxu0 0
    %1023 = vmatpush2.bf16.xpose.msra.mxu0 0
    %1024 = vmatprep.subr.bf16.mxu0 0
    %1025 = vmatpush2.bf16.xpose.msra.mxu0 0
    %1026 = vmatprep.subr.bf16.mxu0 0
    %1027 = vmatpush2.bf16.xpose.msra.mxu0 0
    %1028 = vmatprep.subr.bf16.mxu0 0
    %1029 = vmatpush2.bf16.xpose.msra.mxu0 0
    %1030 = vmatprep.subr.bf16.mxu0 0
    %1031 = vmatpush2.bf16.xpose.msra.mxu0 0
    %1032 = vmatprep.subr.bf16.mxu0 0
    %1033 = vmatpush2.bf16.xpose.msra.mxu0 0
    %1034 = vmatprep.mubr.bf16.mxu0 0
    %1035 = vmatmul.mubr.bf16.gmra.mxu0 %v997
    %v1036 = vpop.f32.mrf.mxu0
    %v1037 = vadd.f32 0.0, %v1036
    %v1038 = vpop.f32.mrf.mxu0
    %v1039 = vpop.f32.mrf.mxu0
    %v1040 = vpop.f32.mrf.mxu0
    %1041 = vdwg.mxu0
    %1042 = vrot.lane.b32.xlu0 %v330, 32
    %v1043 = vpop.permute.xlu0 %1042
    %1044 = vrot.lane.b32.xlu0 %v332, 32
    %v1045 = vpop.permute.xlu0 %1044
    %v1047 = vsel %vm335, %v1043, 0
    %v1050 = vsel %vm335, %v1045, 0
    %1052 = vmatprep.subr.bf16.mxu0 0
    %1053 = vmatpush1.bf16.xpose.msra.mxu0 0
    %1054 = vmatprep.subr.bf16.mxu0 0
    %1055 = vmatpush1.bf16.xpose.msra.mxu0 0
    %1056 = vmatprep.subr.bf16.mxu0 0
    %1057 = vmatpush1.bf16.xpose.msra.mxu0 0
    %1058 = vmatprep.subr.bf16.mxu0 0
    %1059 = vmatpush1.bf16.xpose.msra.mxu0 0
    %1060 = vmatprep.subr.bf16.mxu0 0
    %1061 = vmatpush1.bf16.xpose.msra.mxu0 0
    %1062 = vmatprep.subr.bf16.mxu0 0
    %1063 = vmatpush1.bf16.xpose.msra.mxu0 0
    %1064 = vmatprep.subr.bf16.mxu0 0
    %1065 = vmatpush1.bf16.xpose.msra.mxu0 0
    %1066 = vmatprep.subr.bf16.mxu0 0
    %1067 = vmatpush1.bf16.xpose.msra.mxu0 %v1050
    %1068 = vmatprep.subr.bf16.mxu0 0
    %1069 = vmatpush2.bf16.xpose.msra.mxu0 0
    %1070 = vmatprep.subr.bf16.mxu0 0
    %1071 = vmatpush2.bf16.xpose.msra.mxu0 0
    %1072 = vmatprep.subr.bf16.mxu0 0
    %1073 = vmatpush2.bf16.xpose.msra.mxu0 0
    %1074 = vmatprep.subr.bf16.mxu0 0
    %1075 = vmatpush2.bf16.xpose.msra.mxu0 0
    %1076 = vmatprep.subr.bf16.mxu0 0
    %1077 = vmatpush2.bf16.xpose.msra.mxu0 0
    %1078 = vmatprep.subr.bf16.mxu0 0
    %1079 = vmatpush2.bf16.xpose.msra.mxu0 0
    %1080 = vmatprep.subr.bf16.mxu0 0
    %1081 = vmatpush2.bf16.xpose.msra.mxu0 0
    %1082 = vmatprep.subr.bf16.mxu0 0
    %1083 = vmatpush2.bf16.xpose.msra.mxu0 0
    %1084 = vmatprep.mubr.bf16.mxu0 0
    %1085 = vmatmul.mubr.bf16.gmra.mxu0 %v1047
    %v1086 = vpop.f32.mrf.mxu0
    %v1087 = vadd.f32 0.0, %v1086
    %v1088 = vpop.f32.mrf.mxu0
    %v1089 = vpop.f32.mrf.mxu0
    %v1090 = vpop.f32.mrf.mxu0
    %1091 = vdwg.mxu0
    %v1092 = vsel %vm428, %v1037, -inf
    %1093 = vmax.xlane.f32.xlu0 %v1092
    %v1094 = vpop.xlane.xlu0 %1093
    %v1095 = vsel %vm428, %v1087, -inf
    %1096 = vmax.xlane.f32.xlu0 %v1095
    %v1097 = vpop.xlane.xlu0 %1096
    %v1098 = vsub.f32 %v1037, %v1094
    %v1099 = vsub.f32 %v1087, %v1097
    %v1100 = vmul.f32 %v1098, 1.442695
    %v1101 = vpow.pop %v1100
    %v1102 = vmul.f32 %v1099, 1.442695
    %v1103 = vpow.pop %v1102
    %v1104 = vsel %vm428, %v1101, 0.0
    %1105 = vadd.xlane.f32.xlu0 %v1104
    %v1106 = vpop.xlane.xlu0 %1105
    %v1107 = vsel %vm428, %v1103, 0.0
    %1108 = vadd.xlane.f32.xlu0 %v1107
    %v1109 = vpop.xlane.xlu0 %1108
    %v1110 = vpack.c.bf16 %v1101, %v1101
    %v1111 = vpack.c.bf16 %v1103, %v1103
    %1112 = vrot.lane.b32.xlu0 %v333, 32
    %v1113 = vpop.permute.xlu0 %1112
    %v1115 = vsel %vm428, %v1110, 0
    %v1118 = vsel %vm452, %v1113, 0
    %1120 = vmatprep.subr.bf16.mxu0 0
    %1121 = vmatpush1.bf16.msra.mxu0 0
    %1122 = vmatprep.subr.bf16.mxu0 0
    %1123 = vmatpush1.bf16.msra.mxu0 0
    %1124 = vmatprep.subr.bf16.mxu0 0
    %1125 = vmatpush1.bf16.msra.mxu0 0
    %1126 = vmatprep.subr.bf16.mxu0 0
    %1127 = vmatpush1.bf16.msra.mxu0 0
    %1128 = vmatprep.subr.bf16.mxu0 0
    %1129 = vmatpush1.bf16.msra.mxu0 0
    %1130 = vmatprep.subr.bf16.mxu0 0
    %1131 = vmatpush1.bf16.msra.mxu0 0
    %1132 = vmatprep.subr.bf16.mxu0 0
    %1133 = vmatpush1.bf16.msra.mxu0 0
    %1134 = vmatprep.subr.bf16.mxu0 0
    %1135 = vmatpush1.bf16.msra.mxu0 %v1118
    %1136 = vmatprep.subr.bf16.mxu0 0
    %1137 = vmatpush2.bf16.msra.mxu0 0
    %1138 = vmatprep.subr.bf16.mxu0 0
    %1139 = vmatpush2.bf16.msra.mxu0 0
    %1140 = vmatprep.subr.bf16.mxu0 0
    %1141 = vmatpush2.bf16.msra.mxu0 0
    %1142 = vmatprep.subr.bf16.mxu0 0
    %1143 = vmatpush2.bf16.msra.mxu0 0
    %1144 = vmatprep.subr.bf16.mxu0 0
    %1145 = vmatpush2.bf16.msra.mxu0 0
    %1146 = vmatprep.subr.bf16.mxu0 0
    %1147 = vmatpush2.bf16.msra.mxu0 0
    %1148 = vmatprep.subr.bf16.mxu0 0
    %1149 = vmatpush2.bf16.msra.mxu0 0
    %1150 = vmatprep.subr.bf16.mxu0 0
    %1151 = vmatpush2.bf16.msra.mxu0 0
    %1152 = vmatprep.mubr.bf16.mxu0 0
    %1153 = vmatmul.mubr.bf16.gmra.mxu0 %v1115
    %v1154 = vpop.f32.mrf.mxu0
    %v1155 = vadd.f32 0.0, %v1154
    %v1156 = vpop.f32.mrf.mxu0
    %v1157 = vpop.f32.mrf.mxu0
    %v1158 = vpop.f32.mrf.mxu0
    %1159 = vdwg.mxu0
    %1160 = vrot.lane.b32.xlu0 %v334, 32
    %v1161 = vpop.permute.xlu0 %1160
    %v1163 = vsel %vm428, %v1111, 0
    %v1166 = vsel %vm452, %v1161, 0
    %1168 = vmatprep.subr.bf16.mxu0 0
    %1169 = vmatpush1.bf16.msra.mxu0 0
    %1170 = vmatprep.subr.bf16.mxu0 0
    %1171 = vmatpush1.bf16.msra.mxu0 0
    %1172 = vmatprep.subr.bf16.mxu0 0
    %1173 = vmatpush1.bf16.msra.mxu0 0
    %1174 = vmatprep.subr.bf16.mxu0 0
    %1175 = vmatpush1.bf16.msra.mxu0 0
    %1176 = vmatprep.subr.bf16.mxu0 0
    %1177 = vmatpush1.bf16.msra.mxu0 0
    %1178 = vmatprep.subr.bf16.mxu0 0
    %1179 = vmatpush1.bf16.msra.mxu0 0
    %1180 = vmatprep.subr.bf16.mxu0 0
    %1181 = vmatpush1.bf16.msra.mxu0 0
    %1182 = vmatprep.subr.bf16.mxu0 0
    %1183 = vmatpush1.bf16.msra.mxu0 %v1166
    %1184 = vmatprep.subr.bf16.mxu0 0
    %1185 = vmatpush2.bf16.msra.mxu0 0
    %1186 = vmatprep.subr.bf16.mxu0 0
    %1187 = vmatpush2.bf16.msra.mxu0 0
    %1188 = vmatprep.subr.bf16.mxu0 0
    %1189 = vmatpush2.bf16.msra.mxu0 0
    %1190 = vmatprep.subr.bf16.mxu0 0
    %1191 = vmatpush2.bf16.msra.mxu0 0
    %1192 = vmatprep.subr.bf16.mxu0 0
    %1193 = vmatpush2.bf16.msra.mxu0 0
    %1194 = vmatprep.subr.bf16.mxu0 0
    %1195 = vmatpush2.bf16.msra.mxu0 0
    %1196 = vmatprep.subr.bf16.mxu0 0
    %1197 = vmatpush2.bf16.msra.mxu0 0
    %1198 = vmatprep.subr.bf16.mxu0 0
    %1199 = vmatpush2.bf16.msra.mxu0 0
    %1200 = vmatprep.mubr.bf16.mxu0 0
    %1201 = vmatmul.mubr.bf16.gmra.mxu0 %v1163
    %v1202 = vpop.f32.mrf.mxu0
    %v1203 = vadd.f32 0.0, %v1202
    %v1204 = vpop.f32.mrf.mxu0
    %v1205 = vpop.f32.mrf.mxu0
    %v1206 = vpop.f32.mrf.mxu0
    %1207 = vdwg.mxu0
    %v1208 = vrcp.pop %v1106
    %v1209 = vrcp.pop %v1109
    %v1210 = vmul.f32 %v1155, %v1208
    %v1211 = vmul.f32 %v1203, %v1209
    %1214 = vrot.lane.b32.xlu0 %v770, 32
    %v1215 = vpop.permute.xlu0 %1214
    %1216 = vrot.lane.b32.xlu0 %v771, 32
    %v1217 = vpop.permute.xlu0 %1216
    %1222 = vrot.lane.b32.xlu0 %v990, 64
    %v1223 = vpop.permute.xlu0 %1222
    %1224 = vrot.lane.b32.xlu0 %v991, 64
    %v1225 = vpop.permute.xlu0 %1224
    %1230 = vrot.lane.b32.xlu0 %v1210, 96
    %v1231 = vpop.permute.xlu0 %1230
    %1232 = vrot.lane.b32.xlu0 %v1211, 96
    %v1233 = vpop.permute.xlu0 %1232
    %v1236 = vsel %vm335, %v544, %v1215
    %v1237 = vsel %vm335, %v545, %v1217
    %vm1238 = vcmask 523264
    %v1239 = vsel %vm1238, %v1236, %v1223
    %v1240 = vsel %vm1238, %v1237, %v1225
    %vm1241 = vcmask 785408
    %v1242 = vsel %vm1241, %v1239, %v1231
    %v1243 = vsel %vm1241, %v1240, %v1233
    %v1244 = vpack.c.bf16 %v1243, %v1242
    %v1245 = vld [vmem:[#allocation7] sm:$0xf]
    %v1246 = vld [vmem:[#allocation7 + $0x4] sm:$0xf]
    %v1247 = vld [vmem:[#allocation7 + $0x8] sm:$0xf]
    %v1248 = vld [vmem:[#allocation7 + $0xc] sm:$0xf]
    %v1249 = vld [vmem:[#allocation7 + $0x10] sm:$0xf]
    %v1250 = vld [vmem:[#allocation7 + $0x14] sm:$0xf]
    %v1251 = vld [vmem:[#allocation7 + $0x18] sm:$0xf]
    %v1252 = vld [vmem:[#allocation7 + $0x1c] sm:$0xf]
    %v1253 = vld [vmem:[#allocation7 + $0x20] sm:$0xf]
    %v1254 = vld [vmem:[#allocation7 + $0x24] sm:$0xf]
    %v1255 = vld [vmem:[#allocation7 + $0x28] sm:$0xf]
    %v1256 = vld [vmem:[#allocation7 + $0x2c] sm:$0xf]
    %v1257 = vld [vmem:[#allocation7 + $0x30] sm:$0xf]
    %v1258 = vld [vmem:[#allocation7 + $0x34] sm:$0xf]
    %v1259 = vld [vmem:[#allocation7 + $0x38] sm:$0xf]
    %v1260 = vld [vmem:[#allocation7 + $0x3c] sm:$0xf]
    %v1261 = vld [vmem:[%s4] sm:$0x1]
    %v1263 = vlaneseq
    %v1264 = vshrl.u32 %v1263, 7
    %v1265 = vsub.s32 0, %v1264
    %v1266 = vrot.slane %v1261, %v1265
    %v1284 = vunpack.c.l.b16 %v1245
    %v1285 = vunpack.c.l.b16 %v1246
    %v1286 = vunpack.c.l.b16 %v1247
    %v1287 = vunpack.c.l.b16 %v1248
    %v1288 = vunpack.c.l.b16 %v1249
    %v1289 = vunpack.c.l.b16 %v1250
    %v1290 = vunpack.c.l.b16 %v1251
    %v1291 = vunpack.c.l.b16 %v1252
    %v1292 = vunpack.c.l.b16 %v1253
    %v1293 = vunpack.c.l.b16 %v1254
    %v1294 = vunpack.c.l.b16 %v1255
    %v1295 = vunpack.c.l.b16 %v1256
    %v1296 = vunpack.c.l.b16 %v1257
    %v1297 = vunpack.c.l.b16 %v1258
    %v1298 = vunpack.c.l.b16 %v1259
    %v1299 = vunpack.c.l.b16 %v1260
    %v1300 = vpack.c.b16 %v1285, %v1284
    %v1301 = vpack.c.b16 %v1287, %v1286
    %v1302 = vpack.c.b16 %v1289, %v1288
    %v1303 = vpack.c.b16 %v1291, %v1290
    %v1304 = vpack.c.b16 %v1293, %v1292
    %v1305 = vpack.c.b16 %v1295, %v1294
    %v1306 = vpack.c.b16 %v1297, %v1296
    %v1307 = vpack.c.b16 %v1299, %v1298
    %1316 = vmatprep.subr.bf16.mxu0 0
    %1317 = vmatpush1.bf16.msra.mxu0 %v1307
    %1318 = vmatprep.subr.bf16.mxu0 0
    %1319 = vmatpush1.bf16.msra.mxu0 %v1306
    %1320 = vmatprep.subr.bf16.mxu0 0
    %1321 = vmatpush1.bf16.msra.mxu0 %v1305
    %1322 = vmatprep.subr.bf16.mxu0 0
    %1323 = vmatpush1.bf16.msra.mxu0 %v1304
    %1324 = vmatprep.subr.bf16.mxu0 0
    %1325 = vmatpush1.bf16.msra.mxu0 %v1303
    %1326 = vmatprep.subr.bf16.mxu0 0
    %1327 = vmatpush1.bf16.msra.mxu0 %v1302
    %1328 = vmatprep.subr.bf16.mxu0 0
    %1329 = vmatpush1.bf16.msra.mxu0 %v1301
    %1330 = vmatprep.subr.bf16.mxu0 0
    %1331 = vmatpush1.bf16.msra.mxu0 %v1300
    %1332 = vmatprep.subr.bf16.mxu0 0
    %1333 = vmatpush2.bf16.msra.mxu0 0
    %1334 = vmatprep.subr.bf16.mxu0 0
    %1335 = vmatpush2.bf16.msra.mxu0 0
    %1336 = vmatprep.subr.bf16.mxu0 0
    %1337 = vmatpush2.bf16.msra.mxu0 0
    %1338 = vmatprep.subr.bf16.mxu0 0
    %1339 = vmatpush2.bf16.msra.mxu0 0
    %1340 = vmatprep.subr.bf16.mxu0 0
    %1341 = vmatpush2.bf16.msra.mxu0 0
    %1342 = vmatprep.subr.bf16.mxu0 0
    %1343 = vmatpush2.bf16.msra.mxu0 0
    %1344 = vmatprep.subr.bf16.mxu0 0
    %1345 = vmatpush2.bf16.msra.mxu0 0
    %1346 = vmatprep.subr.bf16.mxu0 0
    %1347 = vmatpush2.bf16.msra.mxu0 0
    %1348 = vmatprep.mubr.bf16.mxu0 0
    %1349 = vmatmul.mubr.bf16.gmra.mxu0 %v1244
    %v1350 = vpop.f32.mrf.mxu0
    %v1351 = vadd.f32 %v1266, %v1350
    %v1352 = vpop.f32.mrf.mxu0
    %v1353 = vpop.f32.mrf.mxu0
    %v1354 = vadd.f32 %v1266, %v1353
    %v1355 = vpop.f32.mrf.mxu0
    %1356 = vdwg.mxu0
    %1357 = vst [vmem:[#allocation8] sm:$0xff] %v1351
    %1358 = vst [vmem:[#allocation8 + $0x8] sm:$0xff] %v1354
    // Predicated region
    $region34: #{tpu_custom_call.1} parent=1 // pred_check
      _
    $region35: #{tpu_custom_call.1} parent=1 // pred_check_branch
      %1360 = sbr.rel (0) target = $region37
    $region36: #{tpu_custom_call.1} parent=1 // pred_region
      %s1362 = ssub.s32 256, 256
      %1363 = vsyncadd [#allocation4], %s1362
      %s1364 = sshll.u32 [#allocation8], 4
      %s1365 = int_to_ptr.vmem [resolvable:$true] %s1364
      %1370 = dma.vmem_to_hbm [thread:$0]  %s1365, 256, %s5, [#allocation4], 128, 128, 8
    $region37: #{tpu_custom_call.1} parent=1 // pred_fallthru
      _
    // Predicated region
    $region38: #{tpu_custom_call.1} parent=1 // pred_check
      _
    $region39: #{tpu_custom_call.1} parent=1 // pred_check_branch
      %1372 = sbr.rel (0) target = $region41
    $region40: #{tpu_custom_call.1} parent=1 // pred_region
      %1373 = dma.done [#allocation4], 256
    $region41: #{tpu_custom_call.1} parent=1 // pred_fallthru
      _
    %1374 = vsyncpa [#allocation3], 1
    %1375 = vsyncpa [#allocation6], 1
    %1376 = vsyncpa [#allocation4], 1

</llo_original>
